<compile_context>
chip_gen: v5e
topology: v5e:2x2
jax: 0.10.0
libtpu: 0.0.40
codegen_flags: <defaults>
</compile_context>

<pallas_src>
import jax
import jax.numpy as jnp
from jax.experimental import pallas as pl
from jax.experimental.pallas import tpu as pltpu


def bottleneck_kernel(x_ref, xup_ref, xdn_ref,
                      w1_ref, b1_ref,
                      w2_ref, b2_ref,
                      w3_ref, b3_ref,
                      out_ref):
    # x_ref:   (1, TH, W, Cin)  bf16   conv1 input + residual
    # xup/xdn: (1, 1, W, Cin)   bf16   clamped halo rows (masked at image edge)
    # w1_ref:  (Cin, P)  bf16 (BN1 scale folded)     b1_ref: (1, P)    f32
    # w2_ref:  (9, P, P) bf16 (BN2 scale folded)     b2_ref: (1, P)    f32
    # w3_ref:  (P, Cout) bf16 (BN3 scale folded)     b3_ref: (1, Cout) f32
    # out_ref: (1, TH, W, Cout) bf16
    _, TH, W, Cin = x_ref.shape
    P = w1_ref.shape[1]
    Cout = w3_ref.shape[1]
    rows = TH * W

    i = pl.program_id(1)
    n_tiles = pl.num_programs(1)

    w1 = w1_ref[...]
    b1 = b1_ref[...]

    def conv1_bn_relu(v):  # (r, Cin) bf16 -> (r, P) f32
        return jnp.maximum(jnp.dot(v, w1, preferred_element_type=jnp.float32) + b1, 0.0)

    x = x_ref[0]                                               # (TH, W, Cin) bf16
    h1m = conv1_bn_relu(x.reshape(rows, Cin))                  # (TH*W, P) f32
    h1u = conv1_bn_relu(xup_ref[0].reshape(W, Cin))            # (W, P)
    h1d = conv1_bn_relu(xdn_ref[0].reshape(W, Cin))            # (W, P)

    # conv2 zero-pads h1 along H: halo rows vanish at the image top / bottom.
    h1u = jnp.where(i == 0, 0.0, h1u)
    h1d = jnp.where(i == n_tiles - 1, 0.0, h1d)

    # (TH + 2, W, P) bf16 conv2 operand: tile row r sees h1e[r : r + 3].
    h1e = jnp.concatenate(
        [h1u.reshape(1, W, P), h1m.reshape(TH, W, P), h1d.reshape(1, W, P)],
        axis=0).astype(jnp.bfloat16)

    # Circular neighbours along W (lr_pad semantics): col w sees (w-1)%W / (w+1)%W.
    # Kept as slice+concat (identical to jnp.roll lowering); a pltpu.roll on the
    # sublane axis is a possible XLU-slot micro-opt.
    left = jnp.concatenate([h1e[:, W - 1:, :], h1e[:, :W - 1, :]], axis=1)   # kw = 0
    right = jnp.concatenate([h1e[:, 1:, :], h1e[:, :1, :]], axis=1)          # kw = 2
    taps = (left, h1e, right)

    # conv2: accumulate the 9 taps as 9 matmuls into one f32 accumulator
    # (no 9*P-wide im2col lane concat).
    acc2 = None
    for kh in range(3):
        for kw in range(3):
            v = taps[kw][kh:kh + TH].reshape(rows, P)
            d = jnp.dot(v, w2_ref[kh * 3 + kw], preferred_element_type=jnp.float32)
            acc2 = d if acc2 is None else acc2 + d
    h2 = jnp.maximum(acc2 + b2_ref[...], 0.0).astype(jnp.bfloat16)           # (rows, P)

    a3 = jnp.dot(h2, w3_ref[...], preferred_element_type=jnp.float32)        # (rows, Cout)
    # bf16 residual added directly (implicit f32 promotion; no f32 copy of x).
    out = jnp.maximum(a3 + b3_ref[...] + x.reshape(rows, Cin), 0.0)
    out_ref[...] = out.astype(out_ref.dtype).reshape(1, TH, W, Cout)


# ----------------------------- wrapper helpers -----------------------------
def _fold_bn(p, eps):
    gamma, beta, mean, var = p
    s = (gamma / jnp.sqrt(var + eps)).astype(jnp.float32)      # (C,)
    b = (beta - mean * s).astype(jnp.float32).reshape(1, -1)   # (1, C)
    return s, b


def _vmem_capacity_bytes():
    try:
        return int(pltpu.get_tpu_info().vmem_capacity_bytes)
    except Exception:
        return 64 * 1024 * 1024   # conservative: v7x per-TensorCore VMEM


def _vmem_per_step_bytes(th, W, Cin, P, Cout):
    bf16, f32 = 2, 4
    rows, halo_rows = th * W, (th + 2) * W
    x_blk = 2 * rows * Cin * bf16              # double-buffered input block
    halos = 2 * 2 * W * Cin * bf16             # two 1-row halos, double-buffered
    out_blk = 2 * rows * Cout * bf16           # double-buffered output block
    weights = 2 * (Cin * P + 9 * P * P + P * Cout) * bf16
    inter = (rows * P * f32                    # h1 f32
             + 3 * halo_rows * P * bf16        # h1e + left + right (bf16)
             + rows * P * f32                  # conv2 accumulator
             + rows * P * bf16                 # h2 bf16
             + rows * Cout * f32)              # conv3 accumulator
    return x_blk + halos + out_blk + weights + inter


def _pick_tile_h(H, W, Cin, P, Cout, N, vmem_budget_bytes):
    divisors = [d for d in range(H, 0, -1) if H % d == 0]
    # Keep >= 2 grid steps when N == 1 so both v7x TensorCores get work.
    max_th = H if N > 1 else max([d for d in divisors if d <= max(H // 2, 1)] or [1])
    for th in divisors:
        if th <= max_th and _vmem_per_step_bytes(th, W, Cin, P, Cout) <= vmem_budget_bytes:
            return th
    return 1


def _full_spec(shape):
    zeros = (0,) * len(shape)
    return pl.BlockSpec(shape, lambda n, i: zeros)


# ------------------------------- public APIs --------------------------------
def bottleneck_forward_nhwc(x_nhwc, w1_oihw, bn1, w2_oihw, bn2, w3_oihw, bn3, eps=1e-5):
    """NHWC-native entry point. Returns (N, H, W, Cout) bf16."""
    N, H, W, Cin = x_nhwc.shape
    P = w1_oihw.shape[0]
    Cout = w3_oihw.shape[0]
    assert Cin == Cout, "identity residual requires inplanes == planes * expansion"
    # TODO(synk): stride > 1 / downsample branch not implemented.

    s1, b1 = _fold_bn(bn1, eps)
    s2, b2 = _fold_bn(bn2, eps)
    s3, b3 = _fold_bn(bn3, eps)

    # PyTorch OIHW weights -> channel-matmul layouts with BN scale folded in (bf16).
    w1 = (jnp.transpose(w1_oihw[:, :, 0, 0], (1, 0)) * s1[None, :]).astype(jnp.bfloat16)
    w2 = (jnp.transpose(w2_oihw, (2, 3, 1, 0)) * s2[None, None, None, :]) \
        .reshape(9, P, P).astype(jnp.bfloat16)                               # (kh*3+kw, Pin, Pout)
    w3 = (jnp.transpose(w3_oihw[:, :, 0, 0], (1, 0)) * s3[None, :]).astype(jnp.bfloat16)

    x = x_nhwc.astype(jnp.bfloat16)

    vmem_cap = _vmem_capacity_bytes()
    vmem_limit = int(min(vmem_cap * 3 // 4, 100 * 1024 * 1024))
    TH = _pick_tile_h(H, W, Cin, P, Cout, N, vmem_limit // 2)
    n_tiles = H // TH

    flops = 2 * N * H * W * (Cin * P + 9 * P * P + P * Cout)
    bytes_accessed = (N * H * W * (Cin + Cout) * 2
                      + (Cin * P + 9 * P * P + P * Cout) * 2
                      + (2 * P + Cout) * 4)

    out = pl.pallas_call(
        bottleneck_kernel,
        out_shape=jax.ShapeDtypeStruct((N, H, W, Cout), jnp.bfloat16),
        grid_spec=pltpu.PrefetchScalarGridSpec(
            num_scalar_prefetch=0,
            grid=(N, n_tiles),
            in_specs=[
                pl.BlockSpec((1, TH, W, Cin), lambda n, i: (n, i, 0, 0)),
                # 1-row halos above / below the tile (clamped; masked in-kernel)
                pl.BlockSpec((1, 1, W, Cin),
                             lambda n, i: (n, jnp.maximum(i * TH - 1, 0), 0, 0)),
                pl.BlockSpec((1, 1, W, Cin),
                             lambda n, i: (n, jnp.minimum((i + 1) * TH, H - 1), 0, 0)),
                _full_spec((Cin, P)), _full_spec((1, P)),
                _full_spec((9, P, P)), _full_spec((1, P)),
                _full_spec((P, Cout)), _full_spec((1, Cout)),
            ],
            out_specs=pl.BlockSpec((1, TH, W, Cout), lambda n, i: (n, i, 0, 0)),
        ),
        compiler_params=pltpu.CompilerParams(
            dimension_semantics=("parallel", "parallel"),
            vmem_limit_bytes=vmem_limit),
        cost_estimate=pl.CostEstimate(flops=flops, transcendentals=0,
                                      bytes_accessed=bytes_accessed),
    )(x, x, x, w1, b1, w2, b2, w3, b3)
    return out


def bottleneck_forward(x_nchw, w1_oihw, bn1, w2_oihw, bn2, w3_oihw, bn3, eps=1e-5):
    """NCHW convenience wrapper (PyTorch layout parity). Prefer the NHWC entry
    point in real pipelines to avoid the two extra HBM transpose passes."""
    x_nhwc = jnp.transpose(x_nchw, (0, 2, 3, 1))
    out = bottleneck_forward_nhwc(x_nhwc, w1_oihw, bn1, w2_oihw, bn2, w3_oihw, bn3, eps)
    return jnp.transpose(out, (0, 3, 1, 2))


# ------------------- pure-JAX reference (mirrors the PyTorch forward) -------------------
def ref_forward(x, w1_oihw, bn1, w2_oihw, bn2, w3_oihw, bn3, eps=1e-5):
    def bn(t, p):
        g, b, m, v = p
        s = g / jnp.sqrt(v + eps)
        return t * s[None, :, None, None] + (b - m * s)[None, :, None, None]

    def conv(t, w, padding):
        return jax.lax.conv_general_dilated(
            t, w, window_strides=(1, 1), padding=padding,
            dimension_numbers=('NCHW', 'OIHW', 'NCHW'))

    out = jax.nn.relu(bn(conv(x, w1_oihw, 'VALID'), bn1))
    out = jnp.concatenate([out[..., -1:], out, out[..., :1]], axis=3)   # lr_pad (circular W)
    out = jax.nn.relu(bn(conv(out, w2_oihw, ((1, 1), (0, 0))), bn2))    # zero-pad H only
    out = bn(conv(out, w3_oihw, 'VALID'), bn3)
    return jax.nn.relu(out + x)


if __name__ == "__main__":
    # Small validation shapes (profile at real widths P>=64, C>=256 separately).
    N, planes, H, W = 2, 4, 16, 16
    inplanes = planes * 4            # identity residual -> inplanes == planes * expansion

    key = jax.random.PRNGKey(0)
    ks = jax.random.split(key, 7)

    x = jax.random.normal(ks[0], (N, inplanes, H, W), jnp.float32)
    w1_oihw = jax.random.normal(ks[1], (planes, inplanes, 1, 1), jnp.float32) * (1.0 / inplanes) ** 0.5
    w2_oihw = jax.random.normal(ks[2], (planes, planes, 3, 3), jnp.float32) * (1.0 / (planes * 9)) ** 0.5
    w3_oihw = jax.random.normal(ks[3], (inplanes, planes, 1, 1), jnp.float32) * (1.0 / planes) ** 0.5

    def bn_params(k, c):
        k1, k2, k3, k4 = jax.random.split(k, 4)
        gamma = 1.0 + 0.1 * jax.random.normal(k1, (c,), jnp.float32)
        beta = 0.1 * jax.random.normal(k2, (c,), jnp.float32)
        mean = 0.1 * jax.random.normal(k3, (c,), jnp.float32)
        var = 0.5 + jax.random.uniform(k4, (c,), jnp.float32)
        return gamma, beta, mean, var

    bn1 = bn_params(ks[4], planes)
    bn2 = bn_params(ks[5], planes)
    bn3 = bn_params(ks[6], inplanes)

    out = bottleneck_forward(x, w1_oihw, bn1, w2_oihw, bn2, w3_oihw, bn3)
    out = jax.block_until_ready(out)

    ref = ref_forward(x, w1_oihw, bn1, w2_oihw, bn2, w3_oihw, bn3)
    assert out.shape == ref.shape == (N, inplanes, H, W)
    max_err = float(jnp.max(jnp.abs(out.astype(jnp.float32) - ref)))
    # bf16 MXU operands, bf16-folded BN scales and a bf16 output / residual.
    assert max_err < 2e-1, f"max abs err too large: {max_err}"

    print("KERNEL_OK")
</pallas_src>

<mosaic_0001>
module attributes {stable_mosaic.version = 11 : i64} {
  func.func @bottleneck_kernel(%arg0: i32, %arg1: i32, %arg2: memref<1x16x16x16xbf16, #tpu.memory_space<vmem>>, %arg3: memref<1x1x16x16xbf16, #tpu.memory_space<vmem>>, %arg4: memref<1x1x16x16xbf16, #tpu.memory_space<vmem>>, %arg5: memref<16x4xbf16, #tpu.memory_space<vmem>>, %arg6: memref<1x4xf32, #tpu.memory_space<vmem>>, %arg7: memref<9x4x4xbf16, #tpu.memory_space<vmem>>, %arg8: memref<1x4xf32, #tpu.memory_space<vmem>>, %arg9: memref<4x16xbf16, #tpu.memory_space<vmem>>, %arg10: memref<1x16xf32, #tpu.memory_space<vmem>>, %arg11: memref<1x16x16x16xbf16, #tpu.memory_space<vmem>>) attributes {dimension_semantics = [#tpu.dimension_semantics<parallel>, #tpu.dimension_semantics<parallel>], iteration_bounds = array<i64: 2, 1>, scalar_prefetch = 0 : i64, scratch_operands = 0 : i64, tpu.core_type = #tpu.core_type<tc>, window_params = [{transform_indices = @transform_0, window_bounds = array<i64: 1, 16, 16, 16>}, {transform_indices = @transform_1, window_bounds = array<i64: 1, 1, 16, 16>}, {transform_indices = @transform_2, window_bounds = array<i64: 1, 1, 16, 16>}, {pipeline_mode = #tpu.pipeline_mode<synchronous>, transform_indices = @transform_3, window_bounds = array<i64: 16, 4>}, {pipeline_mode = #tpu.pipeline_mode<synchronous>, transform_indices = @transform_4, window_bounds = array<i64: 1, 4>}, {pipeline_mode = #tpu.pipeline_mode<synchronous>, transform_indices = @transform_5, window_bounds = array<i64: 9, 4, 4>}, {pipeline_mode = #tpu.pipeline_mode<synchronous>, transform_indices = @transform_6, window_bounds = array<i64: 1, 4>}, {pipeline_mode = #tpu.pipeline_mode<synchronous>, transform_indices = @transform_7, window_bounds = array<i64: 4, 16>}, {pipeline_mode = #tpu.pipeline_mode<synchronous>, transform_indices = @transform_8, window_bounds = array<i64: 1, 16>}, {transform_indices = @transform_9, window_bounds = array<i64: 1, 16, 16, 16>}]} {
    %c0 = arith.constant 0 : index
    %c0_0 = arith.constant 0 : index
    %0 = vector.load %arg5[%c0, %c0_0] : memref<16x4xbf16, #tpu.memory_space<vmem>>, vector<16x4xbf16>
    %c0_1 = arith.constant 0 : index
    %c0_2 = arith.constant 0 : index
    %1 = vector.load %arg6[%c0_1, %c0_2] : memref<1x4xf32, #tpu.memory_space<vmem>>, vector<1x4xf32>
    %c0_3 = arith.constant 0 : index
    %c0_4 = arith.constant 0 : index
    %c0_5 = arith.constant 0 : index
    %c0_6 = arith.constant 0 : index
    %2 = vector.load %arg2[%c0_3, %c0_4, %c0_5, %c0_6] : memref<1x16x16x16xbf16, #tpu.memory_space<vmem>>, vector<1x16x16x16xbf16>
    %3 = vector.shape_cast %2 : vector<1x16x16x16xbf16> to vector<16x16x16xbf16>
    %4 = vector.shape_cast %3 : vector<16x16x16xbf16> to vector<256x16xbf16>
    %cst = arith.constant dense<0.000000e+00> : vector<256x4xf32>
    %5 = tpu.matmul %4, %0, %cst {dimension_numbers = #tpu.dot_dimension_numbers<[1], [0], [0], [1], [0, 0, 1, 1], [], []>} : vector<256x16xbf16>, vector<16x4xbf16>, vector<256x4xf32> -> vector<256x4xf32>
    %6 = vector.broadcast %1 : vector<1x4xf32> to vector<256x4xf32>
    %7 = arith.addf %5, %6 : vector<256x4xf32>
    %cst_7 = arith.constant 0.000000e+00 : f32
    %8 = vector.broadcast %cst_7 : f32 to vector<256x4xf32>
    %9 = arith.maximumf %7, %8 : vector<256x4xf32>
    %c0_8 = arith.constant 0 : index
    %c0_9 = arith.constant 0 : index
    %c0_10 = arith.constant 0 : index
    %c0_11 = arith.constant 0 : index
    %10 = vector.load %arg3[%c0_8, %c0_9, %c0_10, %c0_11] : memref<1x1x16x16xbf16, #tpu.memory_space<vmem>>, vector<1x1x16x16xbf16>
    %11 = vector.shape_cast %10 : vector<1x1x16x16xbf16> to vector<1x16x16xbf16>
    %12 = vector.shape_cast %11 : vector<1x16x16xbf16> to vector<16x16xbf16>
    %cst_12 = arith.constant dense<0.000000e+00> : vector<16x4xf32>
    %13 = tpu.matmul %12, %0, %cst_12 {dimension_numbers = #tpu.dot_dimension_numbers<[1], [0], [0], [1], [0, 0, 1, 1], [], []>} : vector<16x16xbf16>, vector<16x4xbf16>, vector<16x4xf32> -> vector<16x4xf32>
    %14 = vector.broadcast %1 : vector<1x4xf32> to vector<16x4xf32>
    %15 = arith.addf %13, %14 : vector<16x4xf32>
    %cst_13 = arith.constant 0.000000e+00 : f32
    %16 = vector.broadcast %cst_13 : f32 to vector<16x4xf32>
    %17 = arith.maximumf %15, %16 : vector<16x4xf32>
    %c0_14 = arith.constant 0 : index
    %c0_15 = arith.constant 0 : index
    %c0_16 = arith.constant 0 : index
    %c0_17 = arith.constant 0 : index
    %18 = vector.load %arg4[%c0_14, %c0_15, %c0_16, %c0_17] : memref<1x1x16x16xbf16, #tpu.memory_space<vmem>>, vector<1x1x16x16xbf16>
    %19 = vector.shape_cast %18 : vector<1x1x16x16xbf16> to vector<1x16x16xbf16>
    %20 = vector.shape_cast %19 : vector<1x16x16xbf16> to vector<16x16xbf16>
    %cst_18 = arith.constant dense<0.000000e+00> : vector<16x4xf32>
    %21 = tpu.matmul %20, %0, %cst_18 {dimension_numbers = #tpu.dot_dimension_numbers<[1], [0], [0], [1], [0, 0, 1, 1], [], []>} : vector<16x16xbf16>, vector<16x4xbf16>, vector<16x4xf32> -> vector<16x4xf32>
    %22 = vector.broadcast %1 : vector<1x4xf32> to vector<16x4xf32>
    %23 = arith.addf %21, %22 : vector<16x4xf32>
    %cst_19 = arith.constant 0.000000e+00 : f32
    %24 = vector.broadcast %cst_19 : f32 to vector<16x4xf32>
    %25 = arith.maximumf %23, %24 : vector<16x4xf32>
    %c0_i32 = arith.constant 0 : i32
    %26 = arith.cmpi eq, %arg1, %c0_i32 : i32
    %cst_20 = arith.constant 0.000000e+00 : f32
    %27 = vector.broadcast %cst_20 : f32 to vector<16x4xf32>
    %28 = arith.select %26, %27, %17 : vector<16x4xf32>
    %c0_i32_21 = arith.constant 0 : i32
    %29 = arith.cmpi eq, %arg1, %c0_i32_21 : i32
    %cst_22 = arith.constant 0.000000e+00 : f32
    %30 = vector.broadcast %cst_22 : f32 to vector<16x4xf32>
    %31 = arith.select %29, %30, %25 : vector<16x4xf32>
    %32 = vector.shape_cast %28 : vector<16x4xf32> to vector<1x16x4xf32>
    %33 = vector.shape_cast %9 : vector<256x4xf32> to vector<16x16x4xf32>
    %34 = vector.shape_cast %31 : vector<16x4xf32> to vector<1x16x4xf32>
    %35 = tpu.concatenate %32, %33, %34 in 0 : vector<1x16x4xf32>, vector<16x16x4xf32>, vector<1x16x4xf32> -> vector<18x16x4xf32>
    %36 = arith.truncf %35 : vector<18x16x4xf32> to vector<18x16x4xbf16>
    %37 = vector.extract_strided_slice %36 {offsets = [0, 15, 0], sizes = [18, 1, 4], strides = [1, 1, 1]} : vector<18x16x4xbf16> to vector<18x1x4xbf16>
    %38 = vector.extract_strided_slice %36 {offsets = [0, 0, 0], sizes = [18, 15, 4], strides = [1, 1, 1]} : vector<18x16x4xbf16> to vector<18x15x4xbf16>
    %39 = tpu.concatenate %37, %38 in 1 : vector<18x1x4xbf16>, vector<18x15x4xbf16> -> vector<18x16x4xbf16>
    %40 = vector.extract_strided_slice %36 {offsets = [0, 1, 0], sizes = [18, 15, 4], strides = [1, 1, 1]} : vector<18x16x4xbf16> to vector<18x15x4xbf16>
    %41 = vector.extract_strided_slice %36 {offsets = [0, 0, 0], sizes = [18, 1, 4], strides = [1, 1, 1]} : vector<18x16x4xbf16> to vector<18x1x4xbf16>
    %42 = tpu.concatenate %40, %41 in 1 : vector<18x15x4xbf16>, vector<18x1x4xbf16> -> vector<18x16x4xbf16>
    %43 = vector.extract_strided_slice %39 {offsets = [0, 0, 0], sizes = [16, 16, 4], strides = [1, 1, 1]} : vector<18x16x4xbf16> to vector<16x16x4xbf16>
    %44 = vector.shape_cast %43 : vector<16x16x4xbf16> to vector<256x4xbf16>
    %c0_23 = arith.constant 0 : index
    %c0_24 = arith.constant 0 : index
    %c0_25 = arith.constant 0 : index
    %45 = vector.load %arg7[%c0_23, %c0_24, %c0_25] : memref<9x4x4xbf16, #tpu.memory_space<vmem>>, vector<1x4x4xbf16>
    %46 = vector.shape_cast %45 : vector<1x4x4xbf16> to vector<4x4xbf16>
    %cst_26 = arith.constant dense<0.000000e+00> : vector<256x4xf32>
    %47 = tpu.matmul %44, %46, %cst_26 {dimension_numbers = #tpu.dot_dimension_numbers<[1], [0], [0], [1], [0, 0, 1, 1], [], []>} : vector<256x4xbf16>, vector<4x4xbf16>, vector<256x4xf32> -> vector<256x4xf32>
    %48 = vector.extract_strided_slice %36 {offsets = [0, 0, 0], sizes = [16, 16, 4], strides = [1, 1, 1]} : vector<18x16x4xbf16> to vector<16x16x4xbf16>
    %49 = vector.shape_cast %48 : vector<16x16x4xbf16> to vector<256x4xbf16>
    %c1 = arith.constant 1 : index
    %c0_27 = arith.constant 0 : index
    %c0_28 = arith.constant 0 : index
    %50 = vector.load %arg7[%c1, %c0_27, %c0_28] : memref<9x4x4xbf16, #tpu.memory_space<vmem>>, vector<1x4x4xbf16>
    %51 = vector.shape_cast %50 : vector<1x4x4xbf16> to vector<4x4xbf16>
    %cst_29 = arith.constant dense<0.000000e+00> : vector<256x4xf32>
    %52 = tpu.matmul %49, %51, %cst_29 {dimension_numbers = #tpu.dot_dimension_numbers<[1], [0], [0], [1], [0, 0, 1, 1], [], []>} : vector<256x4xbf16>, vector<4x4xbf16>, vector<256x4xf32> -> vector<256x4xf32>
    %53 = arith.addf %47, %52 : vector<256x4xf32>
    %54 = vector.extract_strided_slice %42 {offsets = [0, 0, 0], sizes = [16, 16, 4], strides = [1, 1, 1]} : vector<18x16x4xbf16> to vector<16x16x4xbf16>
    %55 = vector.shape_cast %54 : vector<16x16x4xbf16> to vector<256x4xbf16>
    %c2 = arith.constant 2 : index
    %c0_30 = arith.constant 0 : index
    %c0_31 = arith.constant 0 : index
    %56 = vector.load %arg7[%c2, %c0_30, %c0_31] : memref<9x4x4xbf16, #tpu.memory_space<vmem>>, vector<1x4x4xbf16>
    %57 = vector.shape_cast %56 : vector<1x4x4xbf16> to vector<4x4xbf16>
    %cst_32 = arith.constant dense<0.000000e+00> : vector<256x4xf32>
    %58 = tpu.matmul %55, %57, %cst_32 {dimension_numbers = #tpu.dot_dimension_numbers<[1], [0], [0], [1], [0, 0, 1, 1], [], []>} : vector<256x4xbf16>, vector<4x4xbf16>, vector<256x4xf32> -> vector<256x4xf32>
    %59 = arith.addf %53, %58 : vector<256x4xf32>
    %60 = vector.extract_strided_slice %39 {offsets = [1, 0, 0], sizes = [16, 16, 4], strides = [1, 1, 1]} : vector<18x16x4xbf16> to vector<16x16x4xbf16>
    %61 = vector.shape_cast %60 : vector<16x16x4xbf16> to vector<256x4xbf16>
    %c3 = arith.constant 3 : index
    %c0_33 = arith.constant 0 : index
    %c0_34 = arith.constant 0 : index
    %62 = vector.load %arg7[%c3, %c0_33, %c0_34] : memref<9x4x4xbf16, #tpu.memory_space<vmem>>, vector<1x4x4xbf16>
    %63 = vector.shape_cast %62 : vector<1x4x4xbf16> to vector<4x4xbf16>
    %cst_35 = arith.constant dense<0.000000e+00> : vector<256x4xf32>
    %64 = tpu.matmul %61, %63, %cst_35 {dimension_numbers = #tpu.dot_dimension_numbers<[1], [0], [0], [1], [0, 0, 1, 1], [], []>} : vector<256x4xbf16>, vector<4x4xbf16>, vector<256x4xf32> -> vector<256x4xf32>
    %65 = arith.addf %59, %64 : vector<256x4xf32>
    %66 = vector.extract_strided_slice %36 {offsets = [1, 0, 0], sizes = [16, 16, 4], strides = [1, 1, 1]} : vector<18x16x4xbf16> to vector<16x16x4xbf16>
    %67 = vector.shape_cast %66 : vector<16x16x4xbf16> to vector<256x4xbf16>
    %c4 = arith.constant 4 : index
    %c0_36 = arith.constant 0 : index
    %c0_37 = arith.constant 0 : index
    %68 = vector.load %arg7[%c4, %c0_36, %c0_37] : memref<9x4x4xbf16, #tpu.memory_space<vmem>>, vector<1x4x4xbf16>
    %69 = vector.shape_cast %68 : vector<1x4x4xbf16> to vector<4x4xbf16>
    %cst_38 = arith.constant dense<0.000000e+00> : vector<256x4xf32>
    %70 = tpu.matmul %67, %69, %cst_38 {dimension_numbers = #tpu.dot_dimension_numbers<[1], [0], [0], [1], [0, 0, 1, 1], [], []>} : vector<256x4xbf16>, vector<4x4xbf16>, vector<256x4xf32> -> vector<256x4xf32>
    %71 = arith.addf %65, %70 : vector<256x4xf32>
    %72 = vector.extract_strided_slice %42 {offsets = [1, 0, 0], sizes = [16, 16, 4], strides = [1, 1, 1]} : vector<18x16x4xbf16> to vector<16x16x4xbf16>
    %73 = vector.shape_cast %72 : vector<16x16x4xbf16> to vector<256x4xbf16>
    %c5 = arith.constant 5 : index
    %c0_39 = arith.constant 0 : index
    %c0_40 = arith.constant 0 : index
    %74 = vector.load %arg7[%c5, %c0_39, %c0_40] : memref<9x4x4xbf16, #tpu.memory_space<vmem>>, vector<1x4x4xbf16>
    %75 = vector.shape_cast %74 : vector<1x4x4xbf16> to vector<4x4xbf16>
    %cst_41 = arith.constant dense<0.000000e+00> : vector<256x4xf32>
    %76 = tpu.matmul %73, %75, %cst_41 {dimension_numbers = #tpu.dot_dimension_numbers<[1], [0], [0], [1], [0, 0, 1, 1], [], []>} : vector<256x4xbf16>, vector<4x4xbf16>, vector<256x4xf32> -> vector<256x4xf32>
    %77 = arith.addf %71, %76 : vector<256x4xf32>
    %78 = vector.extract_strided_slice %39 {offsets = [2, 0, 0], sizes = [16, 16, 4], strides = [1, 1, 1]} : vector<18x16x4xbf16> to vector<16x16x4xbf16>
    %79 = vector.shape_cast %78 : vector<16x16x4xbf16> to vector<256x4xbf16>
    %c6 = arith.constant 6 : index
    %c0_42 = arith.constant 0 : index
    %c0_43 = arith.constant 0 : index
    %80 = vector.load %arg7[%c6, %c0_42, %c0_43] : memref<9x4x4xbf16, #tpu.memory_space<vmem>>, vector<1x4x4xbf16>
    %81 = vector.shape_cast %80 : vector<1x4x4xbf16> to vector<4x4xbf16>
    %cst_44 = arith.constant dense<0.000000e+00> : vector<256x4xf32>
    %82 = tpu.matmul %79, %81, %cst_44 {dimension_numbers = #tpu.dot_dimension_numbers<[1], [0], [0], [1], [0, 0, 1, 1], [], []>} : vector<256x4xbf16>, vector<4x4xbf16>, vector<256x4xf32> -> vector<256x4xf32>
    %83 = arith.addf %77, %82 : vector<256x4xf32>
    %84 = vector.extract_strided_slice %36 {offsets = [2, 0, 0], sizes = [16, 16, 4], strides = [1, 1, 1]} : vector<18x16x4xbf16> to vector<16x16x4xbf16>
    %85 = vector.shape_cast %84 : vector<16x16x4xbf16> to vector<256x4xbf16>
    %c7 = arith.constant 7 : index
    %c0_45 = arith.constant 0 : index
    %c0_46 = arith.constant 0 : index
    %86 = vector.load %arg7[%c7, %c0_45, %c0_46] : memref<9x4x4xbf16, #tpu.memory_space<vmem>>, vector<1x4x4xbf16>
    %87 = vector.shape_cast %86 : vector<1x4x4xbf16> to vector<4x4xbf16>
    %cst_47 = arith.constant dense<0.000000e+00> : vector<256x4xf32>
    %88 = tpu.matmul %85, %87, %cst_47 {dimension_numbers = #tpu.dot_dimension_numbers<[1], [0], [0], [1], [0, 0, 1, 1], [], []>} : vector<256x4xbf16>, vector<4x4xbf16>, vector<256x4xf32> -> vector<256x4xf32>
    %89 = arith.addf %83, %88 : vector<256x4xf32>
    %90 = vector.extract_strided_slice %42 {offsets = [2, 0, 0], sizes = [16, 16, 4], strides = [1, 1, 1]} : vector<18x16x4xbf16> to vector<16x16x4xbf16>
    %91 = vector.shape_cast %90 : vector<16x16x4xbf16> to vector<256x4xbf16>
    %c8 = arith.constant 8 : index
    %c0_48 = arith.constant 0 : index
    %c0_49 = arith.constant 0 : index
    %92 = vector.load %arg7[%c8, %c0_48, %c0_49] : memref<9x4x4xbf16, #tpu.memory_space<vmem>>, vector<1x4x4xbf16>
    %93 = vector.shape_cast %92 : vector<1x4x4xbf16> to vector<4x4xbf16>
    %cst_50 = arith.constant dense<0.000000e+00> : vector<256x4xf32>
    %94 = tpu.matmul %91, %93, %cst_50 {dimension_numbers = #tpu.dot_dimension_numbers<[1], [0], [0], [1], [0, 0, 1, 1], [], []>} : vector<256x4xbf16>, vector<4x4xbf16>, vector<256x4xf32> -> vector<256x4xf32>
    %95 = arith.addf %89, %94 : vector<256x4xf32>
    %c0_51 = arith.constant 0 : index
    %c0_52 = arith.constant 0 : index
    %96 = vector.load %arg8[%c0_51, %c0_52] : memref<1x4xf32, #tpu.memory_space<vmem>>, vector<1x4xf32>
    %97 = vector.broadcast %96 : vector<1x4xf32> to vector<256x4xf32>
    %98 = arith.addf %95, %97 : vector<256x4xf32>
    %cst_53 = arith.constant 0.000000e+00 : f32
    %99 = vector.broadcast %cst_53 : f32 to vector<256x4xf32>
    %100 = arith.maximumf %98, %99 : vector<256x4xf32>
    %101 = arith.truncf %100 : vector<256x4xf32> to vector<256x4xbf16>
    %c0_54 = arith.constant 0 : index
    %c0_55 = arith.constant 0 : index
    %102 = vector.load %arg9[%c0_54, %c0_55] : memref<4x16xbf16, #tpu.memory_space<vmem>>, vector<4x16xbf16>
    %cst_56 = arith.constant dense<0.000000e+00> : vector<256x16xf32>
    %103 = tpu.matmul %101, %102, %cst_56 {dimension_numbers = #tpu.dot_dimension_numbers<[1], [0], [0], [1], [0, 0, 1, 1], [], []>} : vector<256x4xbf16>, vector<4x16xbf16>, vector<256x16xf32> -> vector<256x16xf32>
    %c0_57 = arith.constant 0 : index
    %c0_58 = arith.constant 0 : index
    %104 = vector.load %arg10[%c0_57, %c0_58] : memref<1x16xf32, #tpu.memory_space<vmem>>, vector<1x16xf32>
    %105 = vector.broadcast %104 : vector<1x16xf32> to vector<256x16xf32>
    %106 = arith.addf %103, %105 : vector<256x16xf32>
    %107 = vector.shape_cast %3 : vector<16x16x16xbf16> to vector<256x16xbf16>
    %108 = arith.extf %107 : vector<256x16xbf16> to vector<256x16xf32>
    %109 = arith.addf %106, %108 : vector<256x16xf32>
    %cst_59 = arith.constant 0.000000e+00 : f32
    %110 = vector.broadcast %cst_59 : f32 to vector<256x16xf32>
    %111 = arith.maximumf %109, %110 : vector<256x16xf32>
    %112 = arith.truncf %111 : vector<256x16xf32> to vector<256x16xbf16>
    %113 = vector.shape_cast %112 : vector<256x16xbf16> to vector<1x16x16x16xbf16>
    %c0_60 = arith.constant 0 : index
    %c0_61 = arith.constant 0 : index
    %c0_62 = arith.constant 0 : index
    %c0_63 = arith.constant 0 : index
    %114 = vector.load %arg11[%c0_60, %c0_61, %c0_62, %c0_63] : memref<1x16x16x16xbf16, #tpu.memory_space<vmem>>, vector<1x16x16x16xbf16>
    tpu.vector_store %arg11[%c0_60, %c0_61, %c0_62, %c0_63], %113 {strides = array<i32>} : memref<1x16x16x16xbf16, #tpu.memory_space<vmem>>, vector<1x16x16x16xbf16>,
    return
  }
  func.func @transform_0(%arg0: i32, %arg1: i32) -> (i32, i32, i32, i32) {
    %c0_i32 = arith.constant 0 : i32
    %c0_i32_0 = arith.constant 0 : i32
    %c0_i32_1 = arith.constant 0 : i32
    return %arg0, %arg1, %c0_i32, %c0_i32_0 : i32, i32, i32, i32
  }
  func.func @transform_1(%arg0: i32, %arg1: i32) -> (i32, i32, i32, i32) {
    %c16_i32 = arith.constant 16 : i32
    %0 = arith.muli %arg1, %c16_i32 : i32
    %c1_i32 = arith.constant 1 : i32
    %1 = arith.subi %0, %c1_i32 : i32
    %c0_i32 = arith.constant 0 : i32
    %2 = arith.maxsi %1, %c0_i32 : i32
    %c0_i32_0 = arith.constant 0 : i32
    %c0_i32_1 = arith.constant 0 : i32
    %c0_i32_2 = arith.constant 0 : i32
    return %arg0, %2, %c0_i32_0, %c0_i32_1 : i32, i32, i32, i32
  }
  func.func @transform_2(%arg0: i32, %arg1: i32) -> (i32, i32, i32, i32) {
    %c1_i32 = arith.constant 1 : i32
    %0 = arith.addi %arg1, %c1_i32 : i32
    %c16_i32 = arith.constant 16 : i32
    %1 = arith.muli %0, %c16_i32 : i32
    %c15_i32 = arith.constant 15 : i32
    %2 = arith.minsi %1, %c15_i32 : i32
    %c0_i32 = arith.constant 0 : i32
    %c0_i32_0 = arith.constant 0 : i32
    %c0_i32_1 = arith.constant 0 : i32
    return %arg0, %2, %c0_i32, %c0_i32_0 : i32, i32, i32, i32
  }
  func.func @transform_3(%arg0: i32, %arg1: i32) -> (i32, i32) {
    %c0_i32 = arith.constant 0 : i32
    %c0_i32_0 = arith.constant 0 : i32
    %c0_i32_1 = arith.constant 0 : i32
    return %c0_i32, %c0_i32_0 : i32, i32
  }
  func.func @transform_4(%arg0: i32, %arg1: i32) -> (i32, i32) {
    %c0_i32 = arith.constant 0 : i32
    %c0_i32_0 = arith.constant 0 : i32
    %c0_i32_1 = arith.constant 0 : i32
    return %c0_i32, %c0_i32_0 : i32, i32
  }
  func.func @transform_5(%arg0: i32, %arg1: i32) -> (i32, i32, i32) {
    %c0_i32 = arith.constant 0 : i32
    %c0_i32_0 = arith.constant 0 : i32
    %c0_i32_1 = arith.constant 0 : i32
    %c0_i32_2 = arith.constant 0 : i32
    return %c0_i32, %c0_i32_0, %c0_i32_1 : i32, i32, i32
  }
  func.func @transform_6(%arg0: i32, %arg1: i32) -> (i32, i32) {
    %c0_i32 = arith.constant 0 : i32
    %c0_i32_0 = arith.constant 0 : i32
    %c0_i32_1 = arith.constant 0 : i32
    return %c0_i32, %c0_i32_0 : i32, i32
  }
  func.func @transform_7(%arg0: i32, %arg1: i32) -> (i32, i32) {
    %c0_i32 = arith.constant 0 : i32
    %c0_i32_0 = arith.constant 0 : i32
    %c0_i32_1 = arith.constant 0 : i32
    return %c0_i32, %c0_i32_0 : i32, i32
  }
  func.func @transform_8(%arg0: i32, %arg1: i32) -> (i32, i32) {
    %c0_i32 = arith.constant 0 : i32
    %c0_i32_0 = arith.constant 0 : i32
    %c0_i32_1 = arith.constant 0 : i32
    return %c0_i32, %c0_i32_0 : i32, i32
  }
  func.func @transform_9(%arg0: i32, %arg1: i32) -> (i32, i32, i32, i32) {
    %c0_i32 = arith.constant 0 : i32
    %c0_i32_0 = arith.constant 0 : i32
    %c0_i32_1 = arith.constant 0 : i32
    return %arg0, %arg1, %c0_i32, %c0_i32_0 : i32, i32, i32, i32
  }
}

</mosaic_0001>

<llo_original>
// kernel: tpu_custom_call.1
$region0: #{tpu_custom_call.1}
  #allocation0 [shape = 'u32[]', space=smem, size = 0x4, offset = 0x4, fixed_abs, tag = 'smem constant byte address 0x4 - core index']
  #allocation1 [shape = 'u32[72,128]{1,0:T(1,128)}', space=vmem, size = 0x9000, scoped, tag = 'internal scratch']
  %s0 = inlined_call_operand.hbm [shape: bf16[2,16,16,16], index: 0, kind: input, shape index: {}]
  %s1 = inlined_call_operand.hbm [shape: bf16[2,16,16,16], index: 1, kind: input, shape index: {}]
  %s2 = inlined_call_operand.hbm [shape: bf16[2,16,16,16], index: 2, kind: input, shape index: {}]
  %s3 = inlined_call_operand.vmem [shape: bf16[16,4], index: 3, kind: input, shape index: {}]
  %s4 = inlined_call_operand.vmem [shape: f32[1,4], index: 4, kind: input, shape index: {}]
  %s5 = inlined_call_operand.vmem [shape: bf16[9,4,4], index: 5, kind: input, shape index: {}]
  %s6 = inlined_call_operand.vmem [shape: f32[1,4], index: 6, kind: input, shape index: {}]
  %s7 = inlined_call_operand.vmem [shape: bf16[4,16], index: 7, kind: input, shape index: {}]
  %s8 = inlined_call_operand.vmem [shape: f32[1,16], index: 8, kind: input, shape index: {}]
  %s9 = inlined_call_operand.hbm [shape: bf16[2,16,16,16], index: 9, kind: output, shape index: {}]
  %s10 = sld [smem:[#allocation0]]
  $region81: #{tpu_custom_call.1} parent=0
    _
  %s12 = ssub.s32 1, %s10
  %s13 = scalar_select 0, %s12, %s10
  $region1: #{tpu_custom_call.1} parent=0
    #allocation2 [shape = 'u8[131072]{0}', space=vmem, size = 0x20000, scoped, tag = 'input window, operand 0']
    #allocation3 [shape = 's32[2]{0}', space=sflag, size = 0x8, scoped, tag = 'scoped memory for tpu_custom_call.1']
    #allocation4 [shape = 's32[2]{0}', space=sflag, size = 0x8, scoped, tag = 'scoped memory for tpu_custom_call.1']
    #allocation5 [shape = 'u8[8192]{0}', space=vmem, size = 0x2000, scoped, tag = 'input window, operand 1']
    #allocation6 [shape = 's32[2]{0}', space=sflag, size = 0x8, scoped, tag = 'scoped memory for tpu_custom_call.1']
    #allocation7 [shape = 'u8[8192]{0}', space=vmem, size = 0x2000, scoped, tag = 'input window, operand 2']
    #allocation8 [shape = 'u8[131072]{0}', space=vmem, size = 0x20000, scoped, tag = 'output window, operand 0']
    %14 = vsyncpa [#allocation3], 0
    %s15 = scalar_lea.sflag [#allocation3], 1
    %16 = vsyncpa %s15, 0
    %17 = vsyncpa [#allocation6], 0
    %s18 = scalar_lea.sflag [#allocation6], 1
    %19 = vsyncpa %s18, 0
    %20 = vsyncpa [#allocation4], 0
    %s21 = scalar_lea.sflag [#allocation4], 1
    %22 = vsyncpa %s21, 0
    loop: start=0, step=1, limit=4
    $region2: #{tpu_custom_call.1} parent=1 // loop_pre_header
      _
    $region3: #{tpu_custom_call.1} parent=1 // loop_header
      %s24 = sphi 0, %s28
      %p25 = scmp.ge.s32.totalorder %s24, 4
      %s31 = sphi 0, %s43
      %s32 = sphi 0, %s39
      %s33 = sphi 0, %s31
      %s34 = sphi 0, %s32
      %s35 = sphi 0, %s33
      %s36 = sphi 0, %s34
      %s48 = sphi 0, %s50
      %s51 = sphi 0, %s48
      %s52 = sphi 0, %s51
      %s68 = sphi 0, %s52
      %s84 = sphi 0, %s86
      %s87 = sphi 0, %s84
      %s88 = sphi 0, %s87
      %s104 = sphi 0, %s88
      %s120 = sphi 0, %s122
      %s123 = sphi 0, %s120
      %s124 = sphi 0, %s123
      %s140 = sphi 0, %s124
      %s144 = sphi 0, %s144
      %s146 = sphi 0, %s144
      %s147 = sphi 0, %s146
      %s161 = sphi 0, %s147
      %s165 = sphi 0, %s165
      %s167 = sphi 0, %s165
      %s168 = sphi 0, %s167
      %s182 = sphi 0, %s168
      %s186 = sphi 0, %s186
      %s188 = sphi 0, %s186
      %s189 = sphi 0, %s188
      %s203 = sphi 0, %s189
      %s207 = sphi 0, %s207
      %s209 = sphi 0, %s207
      %s210 = sphi 0, %s209
      %s224 = sphi 0, %s210
      %s228 = sphi 0, %s228
      %s230 = sphi 0, %s228
      %s231 = sphi 0, %s230
      %s245 = sphi 0, %s231
      %s249 = sphi 0, %s249
      %s251 = sphi 0, %s249
      %s252 = sphi 0, %s251
      %s266 = sphi 0, %s252
      %s274 = sphi 0, %s276
      %s277 = sphi 0, %s274
      %s278 = sphi 0, %s277
      %s294 = sphi 0, %s278
    $region4: #{tpu_custom_call.1} parent=1 // loop_header_branch
      %27 = sbr.rel (%p25) target = $region8
    $region5: #{tpu_custom_call.1} parent=1 // loop_body
      %s29 = ssub.s32 %s24, 1
      %s30 = ssub.s32 %s24, 2
      %s37 = sadd.s32 1, %s32
      %p38 = scmp.ge.s32.totalorder %s37, 1
      %s39 = scalar_select %p38, 0, %s37
      %s40 = sadd.s32 1, %s31
      %s41 = scalar_select %p38, %s40, %s31
      %p42 = scmp.ge.s32.totalorder %s41, 2
      %s43 = scalar_select %p42, 0, %s41
      %s44 = ssub.s32 %s31, %s43
      %s45 = ssub.s32 %s32, %s39
      %s46 = sor.u32 %s44, %s45
      %p47 = scmp.eq.s32.totalorder %s46, 0
      %s49 = sadd.s32 %s48, 1
      %s50 = scalar_select %p47, %s48, %s49
      %p53 = pneg %p47
      %p54 = scmp.eq.s32.totalorder %s24, 1
      %p55 = por %p53, %p54
      %p56 = scmp.ne.s32.totalorder %s48, %s51
      %p57 = scmp.eq.s32.totalorder %s24, 0
      %p58 = por %p56, %p57
      %p59 = scmp.ne.s32.totalorder %s48, %s51
      %p60 = scmp.eq.s32.totalorder %s29, 1
      %p61 = por %p59, %p60
      %p62 = scmp.ne.s32.totalorder %s51, %s52
      %p63 = scmp.eq.s32.totalorder %s29, 0
      %p64 = por %p62, %p63
      %p65 = scmp.ne.s32.totalorder %s51, %s52
      %p66 = scmp.eq.s32.totalorder %s30, 1
      %p67 = por %p65, %p66
      %p69 = scmp.ne.s32.totalorder %s52, %s68
      %p70 = scmp.eq.s32.totalorder %s30, 0
      %p71 = por %p69, %p70
      %s72 = smul.u32 %s32, 16
      %s73 = ssub.s32 %s72, 1
      %p74 = scmp.gt.s32.totalorder %s73, 0
      %s75 = scalar_select %p74, %s73, 0
      %s76 = smul.u32 %s39, 16
      %s77 = ssub.s32 %s76, 1
      %p78 = scmp.gt.s32.totalorder %s77, 0
      %s79 = scalar_select %p78, %s77, 0
      %s80 = ssub.s32 %s31, %s43
      %s81 = ssub.s32 %s75, %s79
      %s82 = sor.u32 %s80, %s81
      %p83 = scmp.eq.s32.totalorder %s82, 0
      %s85 = sadd.s32 %s84, 1
      %s86 = scalar_select %p83, %s84, %s85
      %p89 = pneg %p83
      %p90 = scmp.eq.s32.totalorder %s24, 1
      %p91 = por %p89, %p90
      %p92 = scmp.ne.s32.totalorder %s84, %s87
      %p93 = scmp.eq.s32.totalorder %s24, 0
      %p94 = por %p92, %p93
      %p95 = scmp.ne.s32.totalorder %s84, %s87
      %p96 = scmp.eq.s32.totalorder %s29, 1
      %p97 = por %p95, %p96
      %p98 = scmp.ne.s32.totalorder %s87, %s88
      %p99 = scmp.eq.s32.totalorder %s29, 0
      %p100 = por %p98, %p99
      %p101 = scmp.ne.s32.totalorder %s87, %s88
      %p102 = scmp.eq.s32.totalorder %s30, 1
      %p103 = por %p101, %p102
      %p105 = scmp.ne.s32.totalorder %s88, %s104
      %p106 = scmp.eq.s32.totalorder %s30, 0
      %p107 = por %p105, %p106
      %s108 = sadd.s32 %s32, 1
      %s109 = smul.u32 %s108, 16
      %p110 = scmp.lt.s32.totalorder %s109, 15
      %s111 = scalar_select %p110, %s109, 15
      %s112 = sadd.s32 %s39, 1
      %s113 = smul.u32 %s112, 16
      %p114 = scmp.lt.s32.totalorder %s113, 15
      %s115 = scalar_select %p114, %s113, 15
      %s116 = ssub.s32 %s31, %s43
      %s117 = ssub.s32 %s111, %s115
      %s118 = sor.u32 %s116, %s117
      %p119 = scmp.eq.s32.totalorder %s118, 0
      %s121 = sadd.s32 %s120, 1
      %s122 = scalar_select %p119, %s120, %s121
      %p125 = pneg %p119
      %p126 = scmp.eq.s32.totalorder %s24, 1
      %p127 = por %p125, %p126
      %p128 = scmp.ne.s32.totalorder %s120, %s123
      %p129 = scmp.eq.s32.totalorder %s24, 0
      %p130 = por %p128, %p129
      %p131 = scmp.ne.s32.totalorder %s120, %s123
      %p132 = scmp.eq.s32.totalorder %s29, 1
      %p133 = por %p131, %p132
      %p134 = scmp.ne.s32.totalorder %s123, %s124
      %p135 = scmp.eq.s32.totalorder %s29, 0
      %p136 = por %p134, %p135
      %p137 = scmp.ne.s32.totalorder %s123, %s124
      %p138 = scmp.eq.s32.totalorder %s30, 1
      %p139 = por %p137, %p138
      %p141 = scmp.ne.s32.totalorder %s124, %s140
      %p142 = scmp.eq.s32.totalorder %s30, 0
      %p143 = por %p141, %p142
      %s145 = sadd.s32 %s144, 1
      %p148 = scmp.eq.s32.totalorder %s24, 1
      %p149 = scmp.ne.s32.totalorder %s144, %s146
      %p150 = scmp.eq.s32.totalorder %s24, 0
      %p151 = por %p149, %p150
      %p152 = scmp.ne.s32.totalorder %s144, %s146
      %p153 = scmp.eq.s32.totalorder %s29, 1
      %p154 = por %p152, %p153
      %p155 = scmp.ne.s32.totalorder %s146, %s147
      %p156 = scmp.eq.s32.totalorder %s29, 0
      %p157 = por %p155, %p156
      %p158 = scmp.ne.s32.totalorder %s146, %s147
      %p159 = scmp.eq.s32.totalorder %s30, 1
      %p160 = por %p158, %p159
      %p162 = scmp.ne.s32.totalorder %s147, %s161
      %p163 = scmp.eq.s32.totalorder %s30, 0
      %p164 = por %p162, %p163
      %s166 = sadd.s32 %s165, 1
      %p169 = scmp.eq.s32.totalorder %s24, 1
      %p170 = scmp.ne.s32.totalorder %s165, %s167
      %p171 = scmp.eq.s32.totalorder %s24, 0
      %p172 = por %p170, %p171
      %p173 = scmp.ne.s32.totalorder %s165, %s167
      %p174 = scmp.eq.s32.totalorder %s29, 1
      %p175 = por %p173, %p174
      %p176 = scmp.ne.s32.totalorder %s167, %s168
      %p177 = scmp.eq.s32.totalorder %s29, 0
      %p178 = por %p176, %p177
      %p179 = scmp.ne.s32.totalorder %s167, %s168
      %p180 = scmp.eq.s32.totalorder %s30, 1
      %p181 = por %p179, %p180
      %p183 = scmp.ne.s32.totalorder %s168, %s182
      %p184 = scmp.eq.s32.totalorder %s30, 0
      %p185 = por %p183, %p184
      %s187 = sadd.s32 %s186, 1
      %p190 = scmp.eq.s32.totalorder %s24, 1
      %p191 = scmp.ne.s32.totalorder %s186, %s188
      %p192 = scmp.eq.s32.totalorder %s24, 0
      %p193 = por %p191, %p192
      %p194 = scmp.ne.s32.totalorder %s186, %s188
      %p195 = scmp.eq.s32.totalorder %s29, 1
      %p196 = por %p194, %p195
      %p197 = scmp.ne.s32.totalorder %s188, %s189
      %p198 = scmp.eq.s32.totalorder %s29, 0
      %p199 = por %p197, %p198
      %p200 = scmp.ne.s32.totalorder %s188, %s189
      %p201 = scmp.eq.s32.totalorder %s30, 1
      %p202 = por %p200, %p201
      %p204 = scmp.ne.s32.totalorder %s189, %s203
      %p205 = scmp.eq.s32.totalorder %s30, 0
      %p206 = por %p204, %p205
      %s208 = sadd.s32 %s207, 1
      %p211 = scmp.eq.s32.totalorder %s24, 1
      %p212 = scmp.ne.s32.totalorder %s207, %s209
      %p213 = scmp.eq.s32.totalorder %s24, 0
      %p214 = por %p212, %p213
      %p215 = scmp.ne.s32.totalorder %s207, %s209
      %p216 = scmp.eq.s32.totalorder %s29, 1
      %p217 = por %p215, %p216
      %p218 = scmp.ne.s32.totalorder %s209, %s210
      %p219 = scmp.eq.s32.totalorder %s29, 0
      %p220 = por %p218, %p219
      %p221 = scmp.ne.s32.totalorder %s209, %s210
      %p222 = scmp.eq.s32.totalorder %s30, 1
      %p223 = por %p221, %p222
      %p225 = scmp.ne.s32.totalorder %s210, %s224
      %p226 = scmp.eq.s32.totalorder %s30, 0
      %p227 = por %p225, %p226
      %s229 = sadd.s32 %s228, 1
      %p232 = scmp.eq.s32.totalorder %s24, 1
      %p233 = scmp.ne.s32.totalorder %s228, %s230
      %p234 = scmp.eq.s32.totalorder %s24, 0
      %p235 = por %p233, %p234
      %p236 = scmp.ne.s32.totalorder %s228, %s230
      %p237 = scmp.eq.s32.totalorder %s29, 1
      %p238 = por %p236, %p237
      %p239 = scmp.ne.s32.totalorder %s230, %s231
      %p240 = scmp.eq.s32.totalorder %s29, 0
      %p241 = por %p239, %p240
      %p242 = scmp.ne.s32.totalorder %s230, %s231
      %p243 = scmp.eq.s32.totalorder %s30, 1
      %p244 = por %p242, %p243
      %p246 = scmp.ne.s32.totalorder %s231, %s245
      %p247 = scmp.eq.s32.totalorder %s30, 0
      %p248 = por %p246, %p247
      %s250 = sadd.s32 %s249, 1
      %p253 = scmp.eq.s32.totalorder %s24, 1
      %p254 = scmp.ne.s32.totalorder %s249, %s251
      %p255 = scmp.eq.s32.totalorder %s24, 0
      %p256 = por %p254, %p255
      %p257 = scmp.ne.s32.totalorder %s249, %s251
      %p258 = scmp.eq.s32.totalorder %s29, 1
      %p259 = por %p257, %p258
      %p260 = scmp.ne.s32.totalorder %s251, %s252
      %p261 = scmp.eq.s32.totalorder %s29, 0
      %p262 = por %p260, %p261
      %p263 = scmp.ne.s32.totalorder %s251, %s252
      %p264 = scmp.eq.s32.totalorder %s30, 1
      %p265 = por %p263, %p264
      %p267 = scmp.ne.s32.totalorder %s252, %s266
      %p268 = scmp.eq.s32.totalorder %s30, 0
      %p269 = por %p267, %p268
      %s270 = ssub.s32 %s31, %s43
      %s271 = ssub.s32 %s32, %s39
      %s272 = sor.u32 %s270, %s271
      %p273 = scmp.eq.s32.totalorder %s272, 0
      %s275 = sadd.s32 %s274, 1
      %s276 = scalar_select %p273, %s274, %s275
      %p279 = pneg %p273
      %p280 = scmp.eq.s32.totalorder %s24, 1
      %p281 = por %p279, %p280
      %p282 = scmp.ne.s32.totalorder %s274, %s277
      %p283 = scmp.eq.s32.totalorder %s24, 0
      %p284 = por %p282, %p283
      %p285 = scmp.ne.s32.totalorder %s274, %s277
      %p286 = scmp.eq.s32.totalorder %s29, 1
      %p287 = por %p285, %p286
      %p288 = scmp.ne.s32.totalorder %s277, %s278
      %p289 = scmp.eq.s32.totalorder %s29, 0
      %p290 = por %p288, %p289
      %p291 = scmp.ne.s32.totalorder %s277, %s278
      %p292 = scmp.eq.s32.totalorder %s30, 1
      %p293 = por %p291, %p292
      %p295 = scmp.ne.s32.totalorder %s278, %s294
      %p296 = scmp.eq.s32.totalorder %s30, 0
      %p297 = por %p295, %p296
      %p298 = scmp.le.s32.totalorder 1, %s24
      %p299 = scmp.lt.s32.totalorder %s24, 3
      %p300 = pnand %p298, %p299
      %p301 = pneg %p300
      // Predicated region
      $region9: #{tpu_custom_call.1} parent=5 // pred_check
        _
      $region10: #{tpu_custom_call.1} parent=5 // pred_check_branch
        %303 = sbr.rel (%p300) target = $region12
      $region11: #{tpu_custom_call.1} parent=5 // pred_region
        %s304 = ssub.s32 %s24, 1
        // Predicated region
        $region13: #{tpu_custom_call.1} parent=11 // pred_check
          %p305 = pneg %p157
        $region14: #{tpu_custom_call.1} parent=11 // pred_check_branch
          %307 = sbr.rel (%p305) target = $region16
        $region15: #{tpu_custom_call.1} parent=11 // pred_region
          _
        $region16: #{tpu_custom_call.1} parent=11 // pred_fallthru
          _
        // Predicated region
        $region17: #{tpu_custom_call.1} parent=11 // pred_check
          %p308 = pneg %p178
        $region18: #{tpu_custom_call.1} parent=11 // pred_check_branch
          %310 = sbr.rel (%p308) target = $region20
        $region19: #{tpu_custom_call.1} parent=11 // pred_region
          _
        $region20: #{tpu_custom_call.1} parent=11 // pred_fallthru
          _
        // Predicated region
        $region21: #{tpu_custom_call.1} parent=11 // pred_check
          %p311 = pneg %p199
        $region22: #{tpu_custom_call.1} parent=11 // pred_check_branch
          %313 = sbr.rel (%p311) target = $region24
        $region23: #{tpu_custom_call.1} parent=11 // pred_region
          _
        $region24: #{tpu_custom_call.1} parent=11 // pred_fallthru
          _
        // Predicated region
        $region25: #{tpu_custom_call.1} parent=11 // pred_check
          %p314 = pneg %p220
        $region26: #{tpu_custom_call.1} parent=11 // pred_check_branch
          %316 = sbr.rel (%p314) target = $region28
        $region27: #{tpu_custom_call.1} parent=11 // pred_region
          _
        $region28: #{tpu_custom_call.1} parent=11 // pred_fallthru
          _
        // Predicated region
        $region29: #{tpu_custom_call.1} parent=11 // pred_check
          %p317 = pneg %p241
        $region30: #{tpu_custom_call.1} parent=11 // pred_check_branch
          %319 = sbr.rel (%p317) target = $region32
        $region31: #{tpu_custom_call.1} parent=11 // pred_region
          _
        $region32: #{tpu_custom_call.1} parent=11 // pred_fallthru
          _
        // Predicated region
        $region33: #{tpu_custom_call.1} parent=11 // pred_check
          %p320 = pneg %p262
        $region34: #{tpu_custom_call.1} parent=11 // pred_check_branch
          %322 = sbr.rel (%p320) target = $region36
        $region35: #{tpu_custom_call.1} parent=11 // pred_region
          _
        $region36: #{tpu_custom_call.1} parent=11 // pred_fallthru
          _
      $region12: #{tpu_custom_call.1} parent=5 // pred_fallthru
        _
      %p323 = scmp.lt.s32.totalorder %s24, 2
      // Predicated region
      $region37: #{tpu_custom_call.1} parent=5 // pred_check
        %p324 = pneg %p323
      $region38: #{tpu_custom_call.1} parent=5 // pred_check_branch
        %326 = sbr.rel (%p324) target = $region40
      $region39: #{tpu_custom_call.1} parent=5 // pred_region
        // Predicated region
        $region41: #{tpu_custom_call.1} parent=39 // pred_check
          %p327 = pneg %p58
        $region42: #{tpu_custom_call.1} parent=39 // pred_check_branch
          %329 = sbr.rel (%p327) target = $region44
        $region43: #{tpu_custom_call.1} parent=39 // pred_region
          %s330 = sand.u32 %s48, 1
          %s331 = scalar_lea.sflag [#allocation3], %s330
          %s332 = sand.u32 %s48, 1
          %s333 = smul.addr %s332, 128
          %s334 = scalar_lea.vmem [#allocation2], %s333
          %s335 = smul.u32 16, %s32
          %337 = vsyncadd %s331, 0
          %s338 = smul.addr %s335, 2
          %s339 = smul.addr %s31, 32
          %s340 = sadd.s32 %s338, %s339
          %s341 = smul.addr %s340, 4
          %s342 = scalar_lea.hbm %s0, %s341
          %s343 = sshll.u32 %s342, 4
          %s344 = int_to_ptr.hbm [resolvable:$true] %s343
          %s345 = sshll.u32 %s334, 4
          %s346 = int_to_ptr.vmem [resolvable:$true] %s345
          %351 = dma.hbm_to_vmem [thread:$0]  %s344, 2048, %s346, %s331, 64, 64, 4
        $region44: #{tpu_custom_call.1} parent=39 // pred_fallthru
          _
        // Predicated region
        $region45: #{tpu_custom_call.1} parent=39 // pred_check
          %p352 = pneg %p94
        $region46: #{tpu_custom_call.1} parent=39 // pred_check_branch
          %354 = sbr.rel (%p352) target = $region48
        $region47: #{tpu_custom_call.1} parent=39 // pred_region
          %s355 = sand.u32 %s24, 1
          %s356 = scalar_lea.sflag [#allocation6], %s355
          %s357 = sand.u32 %s84, 1
          %s358 = smul.addr %s357, 8
          %s359 = scalar_lea.vmem [#allocation5], %s358
          %s360 = smul.u32 %s32, 16
          %s361 = ssub.s32 %s360, 1
          %p362 = scmp.gt.s32.totalorder %s361, 0
          %s363 = scalar_select %p362, %s361, 0
          %365 = vsyncadd %s356, 0
          %s366 = smul.addr %s363, 2
          %s367 = smul.addr %s31, 32
          %s368 = sadd.s32 %s366, %s367
          %s369 = smul.addr %s368, 4
          %s370 = scalar_lea.hbm %s1, %s369
          %s371 = sshll.u32 %s370, 4
          %s372 = int_to_ptr.hbm [resolvable:$true] %s371
          %s373 = sshll.u32 %s359, 4
          %s374 = int_to_ptr.vmem [resolvable:$true] %s373
          %379 = dma.hbm_to_vmem [thread:$0]  %s372, 128, %s374, %s356, 64, 64, 4
        $region48: #{tpu_custom_call.1} parent=39 // pred_fallthru
          _
        // Predicated region
        $region49: #{tpu_custom_call.1} parent=39 // pred_check
          %p380 = pneg %p130
        $region50: #{tpu_custom_call.1} parent=39 // pred_check_branch
          %382 = sbr.rel (%p380) target = $region52
        $region51: #{tpu_custom_call.1} parent=39 // pred_region
          %s383 = sand.u32 %s24, 1
          %s384 = scalar_lea.sflag [#allocation6], %s383
          %s385 = sand.u32 %s120, 1
          %s386 = smul.addr %s385, 8
          %s387 = scalar_lea.vmem [#allocation7], %s386
          %s388 = sadd.s32 %s32, 1
          %s389 = smul.u32 %s388, 16
          %p390 = scmp.lt.s32.totalorder %s389, 15
          %s391 = scalar_select %p390, %s389, 15
          %393 = vsyncadd %s384, 0
          %s394 = smul.addr %s391, 2
          %s395 = smul.addr %s31, 32
          %s396 = sadd.s32 %s394, %s395
          %s397 = smul.addr %s396, 4
          %s398 = scalar_lea.hbm %s2, %s397
          %s399 = sshll.u32 %s398, 4
          %s400 = int_to_ptr.hbm [resolvable:$true] %s399
          %s401 = sshll.u32 %s387, 4
          %s402 = int_to_ptr.vmem [resolvable:$true] %s401
          %407 = dma.hbm_to_vmem [thread:$0]  %s400, 128, %s402, %s384, 64, 64, 4
        $region52: #{tpu_custom_call.1} parent=39 // pred_fallthru
          _
      $region40: #{tpu_custom_call.1} parent=5 // pred_fallthru
        _
      %p408 = scmp.le.s32.totalorder 1, %s24
      %p409 = scmp.lt.s32.totalorder %s24, 3
      %p410 = pnand %p408, %p409
      %p411 = pneg %p410
      // Predicated region
      $region53: #{tpu_custom_call.1} parent=5 // pred_check
        _
      $region54: #{tpu_custom_call.1} parent=5 // pred_check_branch
        %413 = sbr.rel (%p410) target = $region56
      $region55: #{tpu_custom_call.1} parent=5 // pred_region
        %s414 = ssub.s32 %s24, 1
        %s415 = sand.u32 %s51, 1
        %s416 = scalar_lea.sflag [#allocation3], %s415
        %s417 = sand.u32 %s51, 1
        %s418 = smul.addr %s417, 128
        %s419 = scalar_lea.vmem [#allocation2], %s418
        // Predicated region
        $region57: #{tpu_custom_call.1} parent=55 // pred_check
          %p420 = pneg %p64
        $region58: #{tpu_custom_call.1} parent=55 // pred_check_branch
          %422 = sbr.rel (%p420) target = $region60
        $region59: #{tpu_custom_call.1} parent=55 // pred_region
          %424 = dma.done %s416, 2048
        $region60: #{tpu_custom_call.1} parent=55 // pred_fallthru
          _
        %s425 = sand.u32 %s29, 1
        %s426 = scalar_lea.sflag [#allocation6], %s425
        %s427 = sand.u32 %s87, 1
        %s428 = smul.addr %s427, 8
        %s429 = scalar_lea.vmem [#allocation5], %s428
        // Predicated region
        $region61: #{tpu_custom_call.1} parent=55 // pred_check
          %p430 = pneg %p100
        $region62: #{tpu_custom_call.1} parent=55 // pred_check_branch
          %432 = sbr.rel (%p430) target = $region64
        $region63: #{tpu_custom_call.1} parent=55 // pred_region
          %434 = dma.done %s426, 128
        $region64: #{tpu_custom_call.1} parent=55 // pred_fallthru
          _
        %s435 = sand.u32 %s29, 1
        %s436 = scalar_lea.sflag [#allocation6], %s435
        %s437 = sand.u32 %s123, 1
        %s438 = smul.addr %s437, 8
        %s439 = scalar_lea.vmem [#allocation7], %s438
        // Predicated region
        $region65: #{tpu_custom_call.1} parent=55 // pred_check
          %p440 = pneg %p136
        $region66: #{tpu_custom_call.1} parent=55 // pred_check_branch
          %442 = sbr.rel (%p440) target = $region68
        $region67: #{tpu_custom_call.1} parent=55 // pred_region
          %444 = dma.done %s436, 128
        $region68: #{tpu_custom_call.1} parent=55 // pred_fallthru
          _
        %s445 = sand.u32 %s51, 1
        %s446 = scalar_lea.sflag [#allocation3], %s445
        %s447 = sand.u32 %s51, 1
        %s448 = smul.addr %s447, 128
        %s449 = scalar_lea.vmem [#allocation2], %s448
        %p450 = pneg %p64
        %p451 = pneg %p61
        %s452 = sand.u32 %s29, 1
        %s453 = scalar_lea.sflag [#allocation6], %s452
        %s454 = sand.u32 %s87, 1
        %s455 = smul.addr %s454, 8
        %s456 = scalar_lea.vmem [#allocation5], %s455
        %p457 = pneg %p100
        %p458 = pneg %p97
        %s459 = sand.u32 %s29, 1
        %s460 = scalar_lea.sflag [#allocation6], %s459
        %s461 = sand.u32 %s123, 1
        %s462 = smul.addr %s461, 8
        %s463 = scalar_lea.vmem [#allocation7], %s462
        %p464 = pneg %p136
        %p465 = pneg %p133
        %p466 = pneg %p157
        %p467 = pneg %p154
        %p468 = pneg %p178
        %p469 = pneg %p175
        %p470 = pneg %p199
        %p471 = pneg %p196
        %p472 = pneg %p220
        %p473 = pneg %p217
        %p474 = pneg %p241
        %p475 = pneg %p238
        %p476 = pneg %p262
        %p477 = pneg %p259
        %p478 = pneg %p290
        %p479 = pneg %p287
        %s480 = sand.u32 %s277, 1
        %s481 = scalar_lea.sflag [#allocation4], %s480
        %s482 = sand.u32 %s277, 1
        %s483 = smul.addr %s482, 128
        %s484 = scalar_lea.vmem [#allocation8], %s483
        %s485 = smul.u32 16, %s34
        %s486 = smul.u32 %s34, 16
        %s487 = ssub.s32 %s486, 1
        %p488 = scmp.gt.s32.totalorder %s487, 0
        %s489 = scalar_select %p488, %s487, 0
        %s490 = sadd.s32 %s34, 1
        %s491 = smul.u32 %s490, 16
        %p492 = scmp.lt.s32.totalorder %s491, 15
        %s493 = scalar_select %p492, %s491, 15
        %s494 = smul.u32 16, %s34
        %v496 = vld [vmem:[%s3] sm:$0xf]
        %v497 = vld [vmem:[%s3 + $0x4] sm:$0xf]
        %v498 = vld [vmem:[%s4] sm:$0x1]
        %v499 = vld [vmem:[%s419] sm:$0xf]
        %v500 = vld [vmem:[%s419 + $0x4] sm:$0xf]
        %v501 = vld [vmem:[%s419 + $0x8] sm:$0xf]
        %v502 = vld [vmem:[%s419 + $0xc] sm:$0xf]
        %v503 = vld [vmem:[%s419 + $0x10] sm:$0xf]
        %v504 = vld [vmem:[%s419 + $0x14] sm:$0xf]
        %v505 = vld [vmem:[%s419 + $0x18] sm:$0xf]
        %v506 = vld [vmem:[%s419 + $0x1c] sm:$0xf]
        %v507 = vld [vmem:[%s419 + $0x20] sm:$0xf]
        %v508 = vld [vmem:[%s419 + $0x24] sm:$0xf]
        %v509 = vld [vmem:[%s419 + $0x28] sm:$0xf]
        %v510 = vld [vmem:[%s419 + $0x2c] sm:$0xf]
        %v511 = vld [vmem:[%s419 + $0x30] sm:$0xf]
        %v512 = vld [vmem:[%s419 + $0x34] sm:$0xf]
        %v513 = vld [vmem:[%s419 + $0x38] sm:$0xf]
        %v514 = vld [vmem:[%s419 + $0x3c] sm:$0xf]
        %v515 = vld [vmem:[%s419 + $0x40] sm:$0xf]
        %v516 = vld [vmem:[%s419 + $0x44] sm:$0xf]
        %v517 = vld [vmem:[%s419 + $0x48] sm:$0xf]
        %v518 = vld [vmem:[%s419 + $0x4c] sm:$0xf]
        %v519 = vld [vmem:[%s419 + $0x50] sm:$0xf]
        %v520 = vld [vmem:[%s419 + $0x54] sm:$0xf]
        %v521 = vld [vmem:[%s419 + $0x58] sm:$0xf]
        %v522 = vld [vmem:[%s419 + $0x5c] sm:$0xf]
        %v523 = vld [vmem:[%s419 + $0x60] sm:$0xf]
        %v524 = vld [vmem:[%s419 + $0x64] sm:$0xf]
        %v525 = vld [vmem:[%s419 + $0x68] sm:$0xf]
        %v526 = vld [vmem:[%s419 + $0x6c] sm:$0xf]
        %v527 = vld [vmem:[%s419 + $0x70] sm:$0xf]
        %v528 = vld [vmem:[%s419 + $0x74] sm:$0xf]
        %v529 = vld [vmem:[%s419 + $0x78] sm:$0xf]
        %v530 = vld [vmem:[%s419 + $0x7c] sm:$0xf]
        %v532 = vperm.slane %v498, 0
        %v566 = vunpack.c.l.b16 %v499
        %v567 = vunpack.c.l.b16 %v500
        %v568 = vunpack.c.l.b16 %v501
        %v569 = vunpack.c.l.b16 %v502
        %v570 = vunpack.c.l.b16 %v503
        %v571 = vunpack.c.l.b16 %v504
        %v572 = vunpack.c.l.b16 %v505
        %v573 = vunpack.c.l.b16 %v506
        %v574 = vunpack.c.l.b16 %v507
        %v575 = vunpack.c.l.b16 %v508
        %v576 = vunpack.c.l.b16 %v509
        %v577 = vunpack.c.l.b16 %v510
        %v578 = vunpack.c.l.b16 %v511
        %v579 = vunpack.c.l.b16 %v512
        %v580 = vunpack.c.l.b16 %v513
        %v581 = vunpack.c.l.b16 %v514
        %v582 = vunpack.c.l.b16 %v515
        %v583 = vunpack.c.l.b16 %v516
        %v584 = vunpack.c.l.b16 %v517
        %v585 = vunpack.c.l.b16 %v518
        %v586 = vunpack.c.l.b16 %v519
        %v587 = vunpack.c.l.b16 %v520
        %v588 = vunpack.c.l.b16 %v521
        %v589 = vunpack.c.l.b16 %v522
        %v590 = vunpack.c.l.b16 %v523
        %v591 = vunpack.c.l.b16 %v524
        %v592 = vunpack.c.l.b16 %v525
        %v593 = vunpack.c.l.b16 %v526
        %v594 = vunpack.c.l.b16 %v527
        %v595 = vunpack.c.l.b16 %v528
        %v596 = vunpack.c.l.b16 %v529
        %v597 = vunpack.c.l.b16 %v530
        %v598 = vpack.c.b16 %v567, %v566
        %v599 = vpack.c.b16 %v569, %v568
        %v600 = vpack.c.b16 %v571, %v570
        %v601 = vpack.c.b16 %v573, %v572
        %v602 = vpack.c.b16 %v575, %v574
        %v603 = vpack.c.b16 %v577, %v576
        %v604 = vpack.c.b16 %v579, %v578
        %v605 = vpack.c.b16 %v581, %v580
        %v606 = vpack.c.b16 %v583, %v582
        %v607 = vpack.c.b16 %v585, %v584
        %v608 = vpack.c.b16 %v587, %v586
        %v609 = vpack.c.b16 %v589, %v588
        %v610 = vpack.c.b16 %v591, %v590
        %v611 = vpack.c.b16 %v593, %v592
        %v612 = vpack.c.b16 %v595, %v594
        %v613 = vpack.c.b16 %v597, %v596
        %v616 = vunpack.c.l.b16 %v496
        %v617 = vunpack.c.l.b16 %v497
        %v618 = vpack.c.b16 %v617, %v616
        %vm620 = vcmask 130048
        %v622 = vsel %vm620, %v598, 0
        %v625 = vsel %vm620, %v599, 0
        %v628 = vsel %vm620, %v600, 0
        %v631 = vsel %vm620, %v601, 0
        %v634 = vsel %vm620, %v602, 0
        %v637 = vsel %vm620, %v603, 0
        %v640 = vsel %vm620, %v604, 0
        %v643 = vsel %vm620, %v605, 0
        %v646 = vsel %vm620, %v606, 0
        %v649 = vsel %vm620, %v607, 0
        %v652 = vsel %vm620, %v608, 0
        %v655 = vsel %vm620, %v609, 0
        %v658 = vsel %vm620, %v610, 0
        %v661 = vsel %vm620, %v611, 0
        %v664 = vsel %vm620, %v612, 0
        %v667 = vsel %vm620, %v613, 0
        %669 = vmatpush.bf16.msra.mxu0 0
        %670 = vmatpush.bf16.msra.mxu0 0
        %671 = vmatpush.bf16.msra.mxu0 0
        %672 = vmatpush.bf16.msra.mxu0 0
        %673 = vmatpush.bf16.msra.mxu0 0
        %674 = vmatpush.bf16.msra.mxu0 0
        %675 = vmatpush.bf16.msra.mxu0 0
        %676 = vmatpush.bf16.msra.mxu0 %v618
        %677 = vmatmul.bf16.gmra.mxu0 %v622
        %v678 = vpop.f32.mrf.mxu0
        %v679 = vadd.f32 %v532, %v678
        %v680 = vpop.f32.mrf.mxu0
        %v681 = vadd.f32 %v532, %v680
        %682 = vmatmul.bf16.gmra.mxu0 %v625
        %v683 = vpop.f32.mrf.mxu0
        %v684 = vadd.f32 %v532, %v683
        %v685 = vpop.f32.mrf.mxu0
        %v686 = vadd.f32 %v532, %v685
        %687 = vmatmul.bf16.gmra.mxu0 %v628
        %v688 = vpop.f32.mrf.mxu0
        %v689 = vadd.f32 %v532, %v688
        %v690 = vpop.f32.mrf.mxu0
        %v691 = vadd.f32 %v532, %v690
        %692 = vmatmul.bf16.gmra.mxu0 %v631
        %v693 = vpop.f32.mrf.mxu0
        %v694 = vadd.f32 %v532, %v693
        %v695 = vpop.f32.mrf.mxu0
        %v696 = vadd.f32 %v532, %v695
        %697 = vmatmul.bf16.gmra.mxu0 %v634
        %v698 = vpop.f32.mrf.mxu0
        %v699 = vadd.f32 %v532, %v698
        %v700 = vpop.f32.mrf.mxu0
        %v701 = vadd.f32 %v532, %v700
        %702 = vmatmul.bf16.gmra.mxu0 %v637
        %v703 = vpop.f32.mrf.mxu0
        %v704 = vadd.f32 %v532, %v703
        %v705 = vpop.f32.mrf.mxu0
        %v706 = vadd.f32 %v532, %v705
        %707 = vmatmul.bf16.gmra.mxu0 %v640
        %v708 = vpop.f32.mrf.mxu0
        %v709 = vadd.f32 %v532, %v708
        %v710 = vpop.f32.mrf.mxu0
        %v711 = vadd.f32 %v532, %v710
        %712 = vmatmul.bf16.gmra.mxu0 %v643
        %v713 = vpop.f32.mrf.mxu0
        %v714 = vadd.f32 %v532, %v713
        %v715 = vpop.f32.mrf.mxu0
        %v716 = vadd.f32 %v532, %v715
        %717 = vmatmul.bf16.gmra.mxu0 %v646
        %v718 = vpop.f32.mrf.mxu0
        %v719 = vadd.f32 %v532, %v718
        %v720 = vpop.f32.mrf.mxu0
        %v721 = vadd.f32 %v532, %v720
        %722 = vmatmul.bf16.gmra.mxu0 %v649
        %v723 = vpop.f32.mrf.mxu0
        %v724 = vadd.f32 %v532, %v723
        %v725 = vpop.f32.mrf.mxu0
        %v726 = vadd.f32 %v532, %v725
        %727 = vmatmul.bf16.gmra.mxu0 %v652
        %v728 = vpop.f32.mrf.mxu0
        %v729 = vadd.f32 %v532, %v728
        %v730 = vpop.f32.mrf.mxu0
        %v731 = vadd.f32 %v532, %v730
        %732 = vmatmul.bf16.gmra.mxu0 %v655
        %v733 = vpop.f32.mrf.mxu0
        %v734 = vadd.f32 %v532, %v733
        %v735 = vpop.f32.mrf.mxu0
        %v736 = vadd.f32 %v532, %v735
        %737 = vmatmul.bf16.gmra.mxu0 %v658
        %v738 = vpop.f32.mrf.mxu0
        %v739 = vadd.f32 %v532, %v738
        %v740 = vpop.f32.mrf.mxu0
        %v741 = vadd.f32 %v532, %v740
        %742 = vmatmul.bf16.gmra.mxu0 %v661
        %v743 = vpop.f32.mrf.mxu0
        %v744 = vadd.f32 %v532, %v743
        %v745 = vpop.f32.mrf.mxu0
        %v746 = vadd.f32 %v532, %v745
        %747 = vmatmul.bf16.gmra.mxu0 %v664
        %v748 = vpop.f32.mrf.mxu0
        %v749 = vadd.f32 %v532, %v748
        %v750 = vpop.f32.mrf.mxu0
        %v751 = vadd.f32 %v532, %v750
        %752 = vmatmul.bf16.gmra.mxu0 %v667
        %v753 = vpop.f32.mrf.mxu0
        %v754 = vadd.f32 %v532, %v753
        %v755 = vpop.f32.mrf.mxu0
        %v756 = vadd.f32 %v532, %v755
        %757 = vdwg.mxu0
        %v758 = vmax.f32 %v679, 0.0
        %v759 = vmax.f32 %v681, 0.0
        %v760 = vmax.f32 %v684, 0.0
        %v761 = vmax.f32 %v686, 0.0
        %v762 = vmax.f32 %v689, 0.0
        %v763 = vmax.f32 %v691, 0.0
        %v764 = vmax.f32 %v694, 0.0
        %v765 = vmax.f32 %v696, 0.0
        %v766 = vmax.f32 %v699, 0.0
        %v767 = vmax.f32 %v701, 0.0
        %v768 = vmax.f32 %v704, 0.0
        %v769 = vmax.f32 %v706, 0.0
        %v770 = vmax.f32 %v709, 0.0
        %v771 = vmax.f32 %v711, 0.0
        %v772 = vmax.f32 %v714, 0.0
        %v773 = vmax.f32 %v716, 0.0
        %v774 = vmax.f32 %v719, 0.0
        %v775 = vmax.f32 %v721, 0.0
        %v776 = vmax.f32 %v724, 0.0
        %v777 = vmax.f32 %v726, 0.0
        %v778 = vmax.f32 %v729, 0.0
        %v779 = vmax.f32 %v731, 0.0
        %v780 = vmax.f32 %v734, 0.0
        %v781 = vmax.f32 %v736, 0.0
        %v782 = vmax.f32 %v739, 0.0
        %v783 = vmax.f32 %v741, 0.0
        %v784 = vmax.f32 %v744, 0.0
        %v785 = vmax.f32 %v746, 0.0
        %v786 = vmax.f32 %v749, 0.0
        %v787 = vmax.f32 %v751, 0.0
        %v788 = vmax.f32 %v754, 0.0
        %v789 = vmax.f32 %v756, 0.0
        %v790 = vld [vmem:[%s429] sm:$0xf]
        %v791 = vld [vmem:[%s429 + $0x4] sm:$0xf]
        %v794 = vunpack.c.l.b16 %v790
        %v795 = vunpack.c.l.b16 %v791
        %v796 = vpack.c.b16 %v795, %v794
        %v798 = vsel %vm620, %v796, 0
        %800 = vmatpush.bf16.msra.mxu0 0
        %801 = vmatpush.bf16.msra.mxu0 0
        %802 = vmatpush.bf16.msra.mxu0 0
        %803 = vmatpush.bf16.msra.mxu0 0
        %804 = vmatpush.bf16.msra.mxu0 0
        %805 = vmatpush.bf16.msra.mxu0 0
        %806 = vmatpush.bf16.msra.mxu0 0
        %807 = vmatpush.bf16.msra.mxu0 %v618
        %808 = vmatmul.bf16.gmra.mxu0 %v798
        %v809 = vpop.f32.mrf.mxu0
        %v810 = vadd.f32 %v532, %v809
        %v811 = vpop.f32.mrf.mxu0
        %v812 = vadd.f32 %v532, %v811
        %813 = vdwg.mxu0
        %v814 = vmax.f32 %v810, 0.0
        %v815 = vmax.f32 %v812, 0.0
        %v816 = vld [vmem:[%s439] sm:$0xf]
        %v817 = vld [vmem:[%s439 + $0x4] sm:$0xf]
        %v820 = vunpack.c.l.b16 %v816
        %v821 = vunpack.c.l.b16 %v817
        %v822 = vpack.c.b16 %v821, %v820
        %v824 = vsel %vm620, %v822, 0
        %826 = vmatpush.bf16.msra.mxu0 0
        %827 = vmatpush.bf16.msra.mxu0 0
        %828 = vmatpush.bf16.msra.mxu0 0
        %829 = vmatpush.bf16.msra.mxu0 0
        %830 = vmatpush.bf16.msra.mxu0 0
        %831 = vmatpush.bf16.msra.mxu0 0
        %832 = vmatpush.bf16.msra.mxu0 0
        %833 = vmatpush.bf16.msra.mxu0 %v618
        %834 = vmatmul.bf16.gmra.mxu0 %v824
        %v835 = vpop.f32.mrf.mxu0
        %v836 = vadd.f32 %v532, %v835
        %v837 = vpop.f32.mrf.mxu0
        %v838 = vadd.f32 %v532, %v837
        %839 = vdwg.mxu0
        %v840 = vmax.f32 %v836, 0.0
        %v841 = vmax.f32 %v838, 0.0
        %p842 = scmp.eq.s32.totalorder %s34, 0
        %s843 = scalar_select %p842, 1, 0
        %v844 = vstv %s843
        %vm845 = vcmp.eq.s32.totalorder %v844, 1
        %v846 = vsel %vm845, 0.0, %v814
        %v847 = vsel %vm845, 0.0, %v815
        %v848 = vsel %vm845, 0.0, %v840
        %v849 = vsel %vm845, 0.0, %v841
        %v850 = vpack.c.bf16 %v846, %v846
        %v851 = vpack.c.bf16 %v847, %v847
        %v852 = vpack.c.bf16 %v758, %v758
        %v853 = vpack.c.bf16 %v759, %v759
        %v854 = vpack.c.bf16 %v760, %v760
        %v855 = vpack.c.bf16 %v761, %v761
        %v856 = vpack.c.bf16 %v762, %v762
        %v857 = vpack.c.bf16 %v763, %v763
        %v858 = vpack.c.bf16 %v764, %v764
        %v859 = vpack.c.bf16 %v765, %v765
        %v860 = vpack.c.bf16 %v766, %v766
        %v861 = vpack.c.bf16 %v767, %v767
        %v862 = vpack.c.bf16 %v768, %v768
        %v863 = vpack.c.bf16 %v769, %v769
        %v864 = vpack.c.bf16 %v770, %v770
        %v865 = vpack.c.bf16 %v771, %v771
        %v866 = vpack.c.bf16 %v772, %v772
        %v867 = vpack.c.bf16 %v773, %v773
        %v868 = vpack.c.bf16 %v774, %v774
        %v869 = vpack.c.bf16 %v775, %v775
        %v870 = vpack.c.bf16 %v776, %v776
        %v871 = vpack.c.bf16 %v777, %v777
        %v872 = vpack.c.bf16 %v778, %v778
        %v873 = vpack.c.bf16 %v779, %v779
        %v874 = vpack.c.bf16 %v780, %v780
        %v875 = vpack.c.bf16 %v781, %v781
        %v876 = vpack.c.bf16 %v782, %v782
        %v877 = vpack.c.bf16 %v783, %v783
        %v878 = vpack.c.bf16 %v784, %v784
        %v879 = vpack.c.bf16 %v785, %v785
        %v880 = vpack.c.bf16 %v786, %v786
        %v881 = vpack.c.bf16 %v787, %v787
        %v882 = vpack.c.bf16 %v788, %v788
        %v883 = vpack.c.bf16 %v789, %v789
        %v884 = vpack.c.bf16 %v848, %v848
        %v885 = vpack.c.bf16 %v849, %v849
        %v904 = vunpack.c.l.b16 %v851
        %v905 = vunpack.c.l.b16 %v853
        %v906 = vunpack.c.l.b16 %v855
        %v907 = vunpack.c.l.b16 %v857
        %v908 = vunpack.c.l.b16 %v859
        %v909 = vunpack.c.l.b16 %v861
        %v910 = vunpack.c.l.b16 %v863
        %v911 = vunpack.c.l.b16 %v865
        %v912 = vunpack.c.l.b16 %v867
        %v913 = vunpack.c.l.b16 %v869
        %v914 = vunpack.c.l.b16 %v871
        %v915 = vunpack.c.l.b16 %v873
        %v916 = vunpack.c.l.b16 %v875
        %v917 = vunpack.c.l.b16 %v877
        %v918 = vunpack.c.l.b16 %v879
        %v919 = vunpack.c.l.b16 %v881
        %v920 = vunpack.c.l.b16 %v883
        %v921 = vunpack.c.l.b16 %v885
        %v922 = vpack.c.b16 %v904, %v904
        %v923 = vpack.c.b16 %v905, %v905
        %v924 = vpack.c.b16 %v906, %v906
        %v925 = vpack.c.b16 %v907, %v907
        %v926 = vpack.c.b16 %v908, %v908
        %v927 = vpack.c.b16 %v909, %v909
        %v928 = vpack.c.b16 %v910, %v910
        %v929 = vpack.c.b16 %v911, %v911
        %v930 = vpack.c.b16 %v912, %v912
        %v931 = vpack.c.b16 %v913, %v913
        %v932 = vpack.c.b16 %v914, %v914
        %v933 = vpack.c.b16 %v915, %v915
        %v934 = vpack.c.b16 %v916, %v916
        %v935 = vpack.c.b16 %v917, %v917
        %v936 = vpack.c.b16 %v918, %v918
        %v937 = vpack.c.b16 %v919, %v919
        %v938 = vpack.c.b16 %v920, %v920
        %v939 = vpack.c.b16 %v921, %v921
        %v941 = vshrl.u32 %v922, 16
        %v943 = vrot.slane %v941, 3
        %v945 = vshrl.u32 %v923, 16
        %v947 = vrot.slane %v945, 3
        %v949 = vshrl.u32 %v924, 16
        %v951 = vrot.slane %v949, 3
        %v953 = vshrl.u32 %v925, 16
        %v955 = vrot.slane %v953, 3
        %v957 = vshrl.u32 %v926, 16
        %v959 = vrot.slane %v957, 3
        %v961 = vshrl.u32 %v927, 16
        %v963 = vrot.slane %v961, 3
        %v965 = vshrl.u32 %v928, 16
        %v967 = vrot.slane %v965, 3
        %v969 = vshrl.u32 %v929, 16
        %v971 = vrot.slane %v969, 3
        %v973 = vshrl.u32 %v930, 16
        %v975 = vrot.slane %v973, 3
        %v977 = vshrl.u32 %v931, 16
        %v979 = vrot.slane %v977, 3
        %v981 = vshrl.u32 %v932, 16
        %v983 = vrot.slane %v981, 3
        %v985 = vshrl.u32 %v933, 16
        %v987 = vrot.slane %v985, 3
        %v989 = vshrl.u32 %v934, 16
        %v991 = vrot.slane %v989, 3
        %v993 = vshrl.u32 %v935, 16
        %v995 = vrot.slane %v993, 3
        %v997 = vshrl.u32 %v936, 16
        %v999 = vrot.slane %v997, 3
        %v1001 = vshrl.u32 %v937, 16
        %v1003 = vrot.slane %v1001, 3
        %v1005 = vshrl.u32 %v938, 16
        %v1007 = vrot.slane %v1005, 3
        %v1009 = vshrl.u32 %v939, 16
        %v1011 = vrot.slane %v1009, 3
        %v1048 = vunpack.c.l.b16 %v850
        %v1049 = vunpack.c.l.b16 %v852
        %v1050 = vunpack.c.l.b16 %v854
        %v1051 = vunpack.c.l.b16 %v856
        %v1052 = vunpack.c.l.b16 %v858
        %v1053 = vunpack.c.l.b16 %v860
        %v1054 = vunpack.c.l.b16 %v862
        %v1055 = vunpack.c.l.b16 %v864
        %v1056 = vunpack.c.l.b16 %v866
        %v1057 = vunpack.c.l.b16 %v868
        %v1058 = vunpack.c.l.b16 %v870
        %v1059 = vunpack.c.l.b16 %v872
        %v1060 = vunpack.c.l.b16 %v874
        %v1061 = vunpack.c.l.b16 %v876
        %v1062 = vunpack.c.l.b16 %v878
        %v1063 = vunpack.c.l.b16 %v880
        %v1064 = vunpack.c.l.b16 %v882
        %v1065 = vunpack.c.l.b16 %v884
        %v1066 = vpack.c.b16 %v904, %v1048
        %v1067 = vpack.c.b16 %v905, %v1049
        %v1068 = vpack.c.b16 %v906, %v1050
        %v1069 = vpack.c.b16 %v907, %v1051
        %v1070 = vpack.c.b16 %v908, %v1052
        %v1071 = vpack.c.b16 %v909, %v1053
        %v1072 = vpack.c.b16 %v910, %v1054
        %v1073 = vpack.c.b16 %v911, %v1055
        %v1074 = vpack.c.b16 %v912, %v1056
        %v1075 = vpack.c.b16 %v913, %v1057
        %v1076 = vpack.c.b16 %v914, %v1058
        %v1077 = vpack.c.b16 %v915, %v1059
        %v1078 = vpack.c.b16 %v916, %v1060
        %v1079 = vpack.c.b16 %v917, %v1061
        %v1080 = vpack.c.b16 %v918, %v1062
        %v1081 = vpack.c.b16 %v919, %v1063
        %v1082 = vpack.c.b16 %v920, %v1064
        %v1083 = vpack.c.b16 %v921, %v1065
        %v1085 = vshrl.u32 %v1066, 16
        %v1087 = vrot.slane %v1085, 7
        %v1088 = vshll.u32 %v1066, 16
        %v1090 = vor.u32 %v1087, %v1088
        %v1092 = vshrl.u32 %v1067, 16
        %v1094 = vrot.slane %v1092, 7
        %v1095 = vshll.u32 %v1067, 16
        %v1097 = vor.u32 %v1094, %v1095
        %v1099 = vshrl.u32 %v1068, 16
        %v1101 = vrot.slane %v1099, 7
        %v1102 = vshll.u32 %v1068, 16
        %v1104 = vor.u32 %v1101, %v1102
        %v1106 = vshrl.u32 %v1069, 16
        %v1108 = vrot.slane %v1106, 7
        %v1109 = vshll.u32 %v1069, 16
        %v1111 = vor.u32 %v1108, %v1109
        %v1113 = vshrl.u32 %v1070, 16
        %v1115 = vrot.slane %v1113, 7
        %v1116 = vshll.u32 %v1070, 16
        %v1118 = vor.u32 %v1115, %v1116
        %v1120 = vshrl.u32 %v1071, 16
        %v1122 = vrot.slane %v1120, 7
        %v1123 = vshll.u32 %v1071, 16
        %v1125 = vor.u32 %v1122, %v1123
        %v1127 = vshrl.u32 %v1072, 16
        %v1129 = vrot.slane %v1127, 7
        %v1130 = vshll.u32 %v1072, 16
        %v1132 = vor.u32 %v1129, %v1130
        %v1134 = vshrl.u32 %v1073, 16
        %v1136 = vrot.slane %v1134, 7
        %v1137 = vshll.u32 %v1073, 16
        %v1139 = vor.u32 %v1136, %v1137
        %v1141 = vshrl.u32 %v1074, 16
        %v1143 = vrot.slane %v1141, 7
        %v1144 = vshll.u32 %v1074, 16
        %v1146 = vor.u32 %v1143, %v1144
        %v1148 = vshrl.u32 %v1075, 16
        %v1150 = vrot.slane %v1148, 7
        %v1151 = vshll.u32 %v1075, 16
        %v1153 = vor.u32 %v1150, %v1151
        %v1155 = vshrl.u32 %v1076, 16
        %v1157 = vrot.slane %v1155, 7
        %v1158 = vshll.u32 %v1076, 16
        %v1160 = vor.u32 %v1157, %v1158
        %v1162 = vshrl.u32 %v1077, 16
        %v1164 = vrot.slane %v1162, 7
        %v1165 = vshll.u32 %v1077, 16
        %v1167 = vor.u32 %v1164, %v1165
        %v1169 = vshrl.u32 %v1078, 16
        %v1171 = vrot.slane %v1169, 7
        %v1172 = vshll.u32 %v1078, 16
        %v1174 = vor.u32 %v1171, %v1172
        %v1176 = vshrl.u32 %v1079, 16
        %v1178 = vrot.slane %v1176, 7
        %v1179 = vshll.u32 %v1079, 16
        %v1181 = vor.u32 %v1178, %v1179
        %v1183 = vshrl.u32 %v1080, 16
        %v1185 = vrot.slane %v1183, 7
        %v1186 = vshll.u32 %v1080, 16
        %v1188 = vor.u32 %v1185, %v1186
        %v1190 = vshrl.u32 %v1081, 16
        %v1192 = vrot.slane %v1190, 7
        %v1193 = vshll.u32 %v1081, 16
        %v1195 = vor.u32 %v1192, %v1193
        %v1197 = vshrl.u32 %v1082, 16
        %v1199 = vrot.slane %v1197, 7
        %v1200 = vshll.u32 %v1082, 16
        %v1202 = vor.u32 %v1199, %v1200
        %v1204 = vshrl.u32 %v1083, 16
        %v1206 = vrot.slane %v1204, 7
        %v1207 = vshll.u32 %v1083, 16
        %v1209 = vor.u32 %v1206, %v1207
        %vm1228 = vcmask 1040384
        %vm1229 = vsmask.f32 256
        %vm1230 = vmand %vm1228, %vm1229
        %v1231 = vsel %vm1230, %v943, %v1090
        %v1232 = vsel %vm1230, %v947, %v1097
        %v1233 = vsel %vm1230, %v951, %v1104
        %v1234 = vsel %vm1230, %v955, %v1111
        %v1235 = vsel %vm1230, %v959, %v1118
        %v1236 = vsel %vm1230, %v963, %v1125
        %v1237 = vsel %vm1230, %v967, %v1132
        %v1238 = vsel %vm1230, %v971, %v1139
        %v1239 = vsel %vm1230, %v975, %v1146
        %v1240 = vsel %vm1230, %v979, %v1153
        %v1241 = vsel %vm1230, %v983, %v1160
        %v1242 = vsel %vm1230, %v987, %v1167
        %v1243 = vsel %vm1230, %v991, %v1174
        %v1244 = vsel %vm1230, %v995, %v1181
        %v1245 = vsel %vm1230, %v999, %v1188
        %v1246 = vsel %vm1230, %v1003, %v1195
        %v1247 = vsel %vm1230, %v1007, %v1202
        %v1248 = vsel %vm1230, %v1011, %v1209
        %v1249 = vrot.slane %v1088, 1
        %v1250 = vor.u32 %v1085, %v1249
        %v1251 = vrot.slane %v1095, 1
        %v1252 = vor.u32 %v1092, %v1251
        %v1253 = vrot.slane %v1102, 1
        %v1254 = vor.u32 %v1099, %v1253
        %v1255 = vrot.slane %v1109, 1
        %v1256 = vor.u32 %v1106, %v1255
        %v1257 = vrot.slane %v1116, 1
        %v1258 = vor.u32 %v1113, %v1257
        %v1259 = vrot.slane %v1123, 1
        %v1260 = vor.u32 %v1120, %v1259
        %v1261 = vrot.slane %v1130, 1
        %v1262 = vor.u32 %v1127, %v1261
        %v1263 = vrot.slane %v1137, 1
        %v1264 = vor.u32 %v1134, %v1263
        %v1265 = vrot.slane %v1144, 1
        %v1266 = vor.u32 %v1141, %v1265
        %v1267 = vrot.slane %v1151, 1
        %v1268 = vor.u32 %v1148, %v1267
        %v1269 = vrot.slane %v1158, 1
        %v1270 = vor.u32 %v1155, %v1269
        %v1271 = vrot.slane %v1165, 1
        %v1272 = vor.u32 %v1162, %v1271
        %v1273 = vrot.slane %v1172, 1
        %v1274 = vor.u32 %v1169, %v1273
        %v1275 = vrot.slane %v1179, 1
        %v1276 = vor.u32 %v1176, %v1275
        %v1277 = vrot.slane %v1186, 1
        %v1278 = vor.u32 %v1183, %v1277
        %v1279 = vrot.slane %v1193, 1
        %v1280 = vor.u32 %v1190, %v1279
        %v1281 = vrot.slane %v1200, 1
        %v1282 = vor.u32 %v1197, %v1281
        %v1283 = vrot.slane %v1207, 1
        %v1284 = vor.u32 %v1204, %v1283
        %v1303 = vpack.c.b16 %v1048, %v1048
        %v1304 = vpack.c.b16 %v1049, %v1049
        %v1305 = vpack.c.b16 %v1050, %v1050
        %v1306 = vpack.c.b16 %v1051, %v1051
        %v1307 = vpack.c.b16 %v1052, %v1052
        %v1308 = vpack.c.b16 %v1053, %v1053
        %v1309 = vpack.c.b16 %v1054, %v1054
        %v1310 = vpack.c.b16 %v1055, %v1055
        %v1311 = vpack.c.b16 %v1056, %v1056
        %v1312 = vpack.c.b16 %v1057, %v1057
        %v1313 = vpack.c.b16 %v1058, %v1058
        %v1314 = vpack.c.b16 %v1059, %v1059
        %v1315 = vpack.c.b16 %v1060, %v1060
        %v1316 = vpack.c.b16 %v1061, %v1061
        %v1317 = vpack.c.b16 %v1062, %v1062
        %v1318 = vpack.c.b16 %v1063, %v1063
        %v1319 = vpack.c.b16 %v1064, %v1064
        %v1320 = vpack.c.b16 %v1065, %v1065
        %v1322 = vshll.u32 %v1303, 16
        %v1324 = vrot.slane %v1322, 1
        %v1326 = vshll.u32 %v1304, 16
        %v1328 = vrot.slane %v1326, 1
        %v1330 = vshll.u32 %v1305, 16
        %v1332 = vrot.slane %v1330, 1
        %v1334 = vshll.u32 %v1306, 16
        %v1336 = vrot.slane %v1334, 1
        %v1338 = vshll.u32 %v1307, 16
        %v1340 = vrot.slane %v1338, 1
        %v1342 = vshll.u32 %v1308, 16
        %v1344 = vrot.slane %v1342, 1
        %v1346 = vshll.u32 %v1309, 16
        %v1348 = vrot.slane %v1346, 1
        %v1350 = vshll.u32 %v1310, 16
        %v1352 = vrot.slane %v1350, 1
        %v1354 = vshll.u32 %v1311, 16
        %v1356 = vrot.slane %v1354, 1
        %v1358 = vshll.u32 %v1312, 16
        %v1360 = vrot.slane %v1358, 1
        %v1362 = vshll.u32 %v1313, 16
        %v1364 = vrot.slane %v1362, 1
        %v1366 = vshll.u32 %v1314, 16
        %v1368 = vrot.slane %v1366, 1
        %v1370 = vshll.u32 %v1315, 16
        %v1372 = vrot.slane %v1370, 1
        %v1374 = vshll.u32 %v1316, 16
        %v1376 = vrot.slane %v1374, 1
        %v1378 = vshll.u32 %v1317, 16
        %v1380 = vrot.slane %v1378, 1
        %v1382 = vshll.u32 %v1318, 16
        %v1384 = vrot.slane %v1382, 1
        %v1386 = vshll.u32 %v1319, 16
        %v1388 = vrot.slane %v1386, 1
        %v1390 = vshll.u32 %v1320, 16
        %v1392 = vrot.slane %v1390, 1
        %vm1411 = vcmask 1047552
        %vm1412 = vsmask.f32 7424
        %vm1413 = vmand %vm1411, %vm1412
        %v1414 = vsel %vm1413, %v1250, %v1324
        %v1415 = vsel %vm1413, %v1252, %v1328
        %v1416 = vsel %vm1413, %v1254, %v1332
        %v1417 = vsel %vm1413, %v1256, %v1336
        %v1418 = vsel %vm1413, %v1258, %v1340
        %v1419 = vsel %vm1413, %v1260, %v1344
        %v1420 = vsel %vm1413, %v1262, %v1348
        %v1421 = vsel %vm1413, %v1264, %v1352
        %v1422 = vsel %vm1413, %v1266, %v1356
        %v1423 = vsel %vm1413, %v1268, %v1360
        %v1424 = vsel %vm1413, %v1270, %v1364
        %v1425 = vsel %vm1413, %v1272, %v1368
        %v1426 = vsel %vm1413, %v1274, %v1372
        %v1427 = vsel %vm1413, %v1276, %v1376
        %v1428 = vsel %vm1413, %v1278, %v1380
        %v1429 = vsel %vm1413, %v1280, %v1384
        %v1430 = vsel %vm1413, %v1282, %v1388
        %v1431 = vsel %vm1413, %v1284, %v1392
        %v1432 = vld [vmem:[%s5] sm:$0x3]
        %s1433 = scalar_lea.vmem %s5, 2
        %v1434 = vld [vmem:[%s1433] sm:$0x3]
        %vm1435 = vcmask 31744
        %v1436 = vsel %vm1435, %v1066, 0
        %v1438 = vsel %vm1435, %v1067, 0
        %v1440 = vsel %vm1435, %v1068, 0
        %v1442 = vsel %vm1435, %v1069, 0
        %v1444 = vsel %vm1435, %v1070, 0
        %v1446 = vsel %vm1435, %v1071, 0
        %v1448 = vsel %vm1435, %v1072, 0
        %v1450 = vsel %vm1435, %v1073, 0
        %v1452 = vsel %vm1435, %v1074, 0
        %v1454 = vsel %vm1435, %v1075, 0
        %v1456 = vsel %vm1435, %v1076, 0
        %v1458 = vsel %vm1435, %v1077, 0
        %v1460 = vsel %vm1435, %v1078, 0
        %v1462 = vsel %vm1435, %v1079, 0
        %v1464 = vsel %vm1435, %v1080, 0
        %v1466 = vsel %vm1435, %v1081, 0
        %vm1468 = vcmask 1041408
        %v1470 = vsel %vm1468, %v1434, 0
        %1472 = vmatpush.bf16.msra.mxu0 0
        %1473 = vmatpush.bf16.msra.mxu0 0
        %1474 = vmatpush.bf16.msra.mxu0 0
        %1475 = vmatpush.bf16.msra.mxu0 0
        %1476 = vmatpush.bf16.msra.mxu0 0
        %1477 = vmatpush.bf16.msra.mxu0 0
        %1478 = vmatpush.bf16.msra.mxu0 0
        %1479 = vmatpush.bf16.msra.mxu0 %v1470
        %1480 = vmatmul.bf16.gmra.mxu0 %v1436
        %v1481 = vpop.f32.mrf.mxu0
        %v1482 = vadd.f32 0.0, %v1481
        %v1483 = vpop.f32.mrf.mxu0
        %v1484 = vadd.f32 0.0, %v1483
        %1485 = vmatmul.bf16.gmra.mxu0 %v1438
        %v1486 = vpop.f32.mrf.mxu0
        %v1487 = vadd.f32 0.0, %v1486
        %v1488 = vpop.f32.mrf.mxu0
        %v1489 = vadd.f32 0.0, %v1488
        %1490 = vmatmul.bf16.gmra.mxu0 %v1440
        %v1491 = vpop.f32.mrf.mxu0
        %v1492 = vadd.f32 0.0, %v1491
        %v1493 = vpop.f32.mrf.mxu0
        %v1494 = vadd.f32 0.0, %v1493
        %1495 = vmatmul.bf16.gmra.mxu0 %v1442
        %v1496 = vpop.f32.mrf.mxu0
        %v1497 = vadd.f32 0.0, %v1496
        %v1498 = vpop.f32.mrf.mxu0
        %v1499 = vadd.f32 0.0, %v1498
        %1500 = vmatmul.bf16.gmra.mxu0 %v1444
        %v1501 = vpop.f32.mrf.mxu0
        %v1502 = vadd.f32 0.0, %v1501
        %v1503 = vpop.f32.mrf.mxu0
        %v1504 = vadd.f32 0.0, %v1503
        %1505 = vmatmul.bf16.gmra.mxu0 %v1446
        %v1506 = vpop.f32.mrf.mxu0
        %v1507 = vadd.f32 0.0, %v1506
        %v1508 = vpop.f32.mrf.mxu0
        %v1509 = vadd.f32 0.0, %v1508
        %1510 = vmatmul.bf16.gmra.mxu0 %v1448
        %v1511 = vpop.f32.mrf.mxu0
        %v1512 = vadd.f32 0.0, %v1511
        %v1513 = vpop.f32.mrf.mxu0
        %v1514 = vadd.f32 0.0, %v1513
        %1515 = vmatmul.bf16.gmra.mxu0 %v1450
        %v1516 = vpop.f32.mrf.mxu0
        %v1517 = vadd.f32 0.0, %v1516
        %v1518 = vpop.f32.mrf.mxu0
        %v1519 = vadd.f32 0.0, %v1518
        %1520 = vmatmul.bf16.gmra.mxu0 %v1452
        %v1521 = vpop.f32.mrf.mxu0
        %v1522 = vadd.f32 0.0, %v1521
        %v1523 = vpop.f32.mrf.mxu0
        %v1524 = vadd.f32 0.0, %v1523
        %1525 = vmatmul.bf16.gmra.mxu0 %v1454
        %v1526 = vpop.f32.mrf.mxu0
        %v1527 = vadd.f32 0.0, %v1526
        %v1528 = vpop.f32.mrf.mxu0
        %v1529 = vadd.f32 0.0, %v1528
        %1530 = vmatmul.bf16.gmra.mxu0 %v1456
        %v1531 = vpop.f32.mrf.mxu0
        %v1532 = vadd.f32 0.0, %v1531
        %v1533 = vpop.f32.mrf.mxu0
        %v1534 = vadd.f32 0.0, %v1533
        %1535 = vmatmul.bf16.gmra.mxu0 %v1458
        %v1536 = vpop.f32.mrf.mxu0
        %v1537 = vadd.f32 0.0, %v1536
        %v1538 = vpop.f32.mrf.mxu0
        %v1539 = vadd.f32 0.0, %v1538
        %1540 = vmatmul.bf16.gmra.mxu0 %v1460
        %v1541 = vpop.f32.mrf.mxu0
        %v1542 = vadd.f32 0.0, %v1541
        %v1543 = vpop.f32.mrf.mxu0
        %v1544 = vadd.f32 0.0, %v1543
        %1545 = vmatmul.bf16.gmra.mxu0 %v1462
        %v1546 = vpop.f32.mrf.mxu0
        %v1547 = vadd.f32 0.0, %v1546
        %v1548 = vpop.f32.mrf.mxu0
        %v1549 = vadd.f32 0.0, %v1548
        %1550 = vmatmul.bf16.gmra.mxu0 %v1464
        %v1551 = vpop.f32.mrf.mxu0
        %v1552 = vadd.f32 0.0, %v1551
        %v1553 = vpop.f32.mrf.mxu0
        %v1554 = vadd.f32 0.0, %v1553
        %1555 = vmatmul.bf16.gmra.mxu0 %v1466
        %v1556 = vpop.f32.mrf.mxu0
        %v1557 = vadd.f32 0.0, %v1556
        %v1558 = vpop.f32.mrf.mxu0
        %v1559 = vadd.f32 0.0, %v1558
        %1560 = vdwg.mxu0
        %v1562 = vsel %vm1435, %v1231, 0
        %v1565 = vsel %vm1435, %v1232, 0
        %v1568 = vsel %vm1435, %v1233, 0
        %v1571 = vsel %vm1435, %v1234, 0
        %v1574 = vsel %vm1435, %v1235, 0
        %v1577 = vsel %vm1435, %v1236, 0
        %v1580 = vsel %vm1435, %v1237, 0
        %v1583 = vsel %vm1435, %v1238, 0
        %v1586 = vsel %vm1435, %v1239, 0
        %v1589 = vsel %vm1435, %v1240, 0
        %v1592 = vsel %vm1435, %v1241, 0
        %v1595 = vsel %vm1435, %v1242, 0
        %v1598 = vsel %vm1435, %v1243, 0
        %v1601 = vsel %vm1435, %v1244, 0
        %v1604 = vsel %vm1435, %v1245, 0
        %v1607 = vsel %vm1435, %v1246, 0
        %v1610 = vsel %vm1468, %v1432, 0
        %1612 = vmatpush.bf16.msra.mxu0 0
        %1613 = vmatpush.bf16.msra.mxu0 0
        %1614 = vmatpush.bf16.msra.mxu0 0
        %1615 = vmatpush.bf16.msra.mxu0 0
        %1616 = vmatpush.bf16.msra.mxu0 0
        %1617 = vmatpush.bf16.msra.mxu0 0
        %1618 = vmatpush.bf16.msra.mxu0 0
        %1619 = vmatpush.bf16.msra.mxu0 %v1610
        %1620 = vmatmul.bf16.gmra.mxu0 %v1562
        %v1621 = vpop.f32.mrf.mxu0
        %v1622 = vadd.f32 %v1482, %v1621
        %v1623 = vpop.f32.mrf.mxu0
        %v1624 = vadd.f32 %v1484, %v1623
        %1625 = vmatmul.bf16.gmra.mxu0 %v1565
        %v1626 = vpop.f32.mrf.mxu0
        %v1627 = vadd.f32 %v1487, %v1626
        %v1628 = vpop.f32.mrf.mxu0
        %v1629 = vadd.f32 %v1489, %v1628
        %1630 = vmatmul.bf16.gmra.mxu0 %v1568
        %v1631 = vpop.f32.mrf.mxu0
        %v1632 = vadd.f32 %v1492, %v1631
        %v1633 = vpop.f32.mrf.mxu0
        %v1634 = vadd.f32 %v1494, %v1633
        %1635 = vmatmul.bf16.gmra.mxu0 %v1571
        %v1636 = vpop.f32.mrf.mxu0
        %v1637 = vadd.f32 %v1497, %v1636
        %v1638 = vpop.f32.mrf.mxu0
        %v1639 = vadd.f32 %v1499, %v1638
        %1640 = vmatmul.bf16.gmra.mxu0 %v1574
        %v1641 = vpop.f32.mrf.mxu0
        %v1642 = vadd.f32 %v1502, %v1641
        %v1643 = vpop.f32.mrf.mxu0
        %v1644 = vadd.f32 %v1504, %v1643
        %1645 = vmatmul.bf16.gmra.mxu0 %v1577
        %v1646 = vpop.f32.mrf.mxu0
        %v1647 = vadd.f32 %v1507, %v1646
        %v1648 = vpop.f32.mrf.mxu0
        %v1649 = vadd.f32 %v1509, %v1648
        %1650 = vmatmul.bf16.gmra.mxu0 %v1580
        %v1651 = vpop.f32.mrf.mxu0
        %v1652 = vadd.f32 %v1512, %v1651
        %v1653 = vpop.f32.mrf.mxu0
        %v1654 = vadd.f32 %v1514, %v1653
        %1655 = vmatmul.bf16.gmra.mxu0 %v1583
        %v1656 = vpop.f32.mrf.mxu0
        %v1657 = vadd.f32 %v1517, %v1656
        %v1658 = vpop.f32.mrf.mxu0
        %v1659 = vadd.f32 %v1519, %v1658
        %1660 = vmatmul.bf16.gmra.mxu0 %v1586
        %v1661 = vpop.f32.mrf.mxu0
        %v1662 = vadd.f32 %v1522, %v1661
        %v1663 = vpop.f32.mrf.mxu0
        %v1664 = vadd.f32 %v1524, %v1663
        %1665 = vmatmul.bf16.gmra.mxu0 %v1589
        %v1666 = vpop.f32.mrf.mxu0
        %v1667 = vadd.f32 %v1527, %v1666
        %v1668 = vpop.f32.mrf.mxu0
        %v1669 = vadd.f32 %v1529, %v1668
        %1670 = vmatmul.bf16.gmra.mxu0 %v1592
        %v1671 = vpop.f32.mrf.mxu0
        %v1672 = vadd.f32 %v1532, %v1671
        %v1673 = vpop.f32.mrf.mxu0
        %v1674 = vadd.f32 %v1534, %v1673
        %1675 = vmatmul.bf16.gmra.mxu0 %v1595
        %v1676 = vpop.f32.mrf.mxu0
        %v1677 = vadd.f32 %v1537, %v1676
        %v1678 = vpop.f32.mrf.mxu0
        %v1679 = vadd.f32 %v1539, %v1678
        %1680 = vmatmul.bf16.gmra.mxu0 %v1598
        %v1681 = vpop.f32.mrf.mxu0
        %v1682 = vadd.f32 %v1542, %v1681
        %v1683 = vpop.f32.mrf.mxu0
        %v1684 = vadd.f32 %v1544, %v1683
        %1685 = vmatmul.bf16.gmra.mxu0 %v1601
        %v1686 = vpop.f32.mrf.mxu0
        %v1687 = vadd.f32 %v1547, %v1686
        %v1688 = vpop.f32.mrf.mxu0
        %v1689 = vadd.f32 %v1549, %v1688
        %1690 = vmatmul.bf16.gmra.mxu0 %v1604
        %v1691 = vpop.f32.mrf.mxu0
        %v1692 = vadd.f32 %v1552, %v1691
        %v1693 = vpop.f32.mrf.mxu0
        %v1694 = vadd.f32 %v1554, %v1693
        %1695 = vmatmul.bf16.gmra.mxu0 %v1607
        %v1696 = vpop.f32.mrf.mxu0
        %v1697 = vadd.f32 %v1557, %v1696
        %v1698 = vpop.f32.mrf.mxu0
        %v1699 = vadd.f32 %v1559, %v1698
        %1700 = vdwg.mxu0
        %s1701 = scalar_lea.vmem %s5, 4
        %v1702 = vld [vmem:[%s1701] sm:$0x3]
        %v1704 = vsel %vm1435, %v1414, 0
        %v1707 = vsel %vm1435, %v1415, 0
        %v1710 = vsel %vm1435, %v1416, 0
        %v1713 = vsel %vm1435, %v1417, 0
        %v1716 = vsel %vm1435, %v1418, 0
        %v1719 = vsel %vm1435, %v1419, 0
        %v1722 = vsel %vm1435, %v1420, 0
        %v1725 = vsel %vm1435, %v1421, 0
        %v1728 = vsel %vm1435, %v1422, 0
        %v1731 = vsel %vm1435, %v1423, 0
        %v1734 = vsel %vm1435, %v1424, 0
        %v1737 = vsel %vm1435, %v1425, 0
        %v1740 = vsel %vm1435, %v1426, 0
        %v1743 = vsel %vm1435, %v1427, 0
        %v1746 = vsel %vm1435, %v1428, 0
        %v1749 = vsel %vm1435, %v1429, 0
        %v1752 = vsel %vm1468, %v1702, 0
        %1754 = vmatpush.bf16.msra.mxu0 0
        %1755 = vmatpush.bf16.msra.mxu0 0
        %1756 = vmatpush.bf16.msra.mxu0 0
        %1757 = vmatpush.bf16.msra.mxu0 0
        %1758 = vmatpush.bf16.msra.mxu0 0
        %1759 = vmatpush.bf16.msra.mxu0 0
        %1760 = vmatpush.bf16.msra.mxu0 0
        %1761 = vmatpush.bf16.msra.mxu0 %v1752
        %1762 = vmatmul.bf16.gmra.mxu0 %v1704
        %v1763 = vpop.f32.mrf.mxu0
        %v1764 = vadd.f32 0.0, %v1763
        %v1765 = vpop.f32.mrf.mxu0
        %v1766 = vadd.f32 0.0, %v1765
        %1767 = vmatmul.bf16.gmra.mxu0 %v1707
        %v1768 = vpop.f32.mrf.mxu0
        %v1769 = vadd.f32 0.0, %v1768
        %v1770 = vpop.f32.mrf.mxu0
        %v1771 = vadd.f32 0.0, %v1770
        %1772 = vmatmul.bf16.gmra.mxu0 %v1710
        %v1773 = vpop.f32.mrf.mxu0
        %v1774 = vadd.f32 0.0, %v1773
        %v1775 = vpop.f32.mrf.mxu0
        %v1776 = vadd.f32 0.0, %v1775
        %1777 = vmatmul.bf16.gmra.mxu0 %v1713
        %v1778 = vpop.f32.mrf.mxu0
        %v1779 = vadd.f32 0.0, %v1778
        %v1780 = vpop.f32.mrf.mxu0
        %v1781 = vadd.f32 0.0, %v1780
        %1782 = vmatmul.bf16.gmra.mxu0 %v1716
        %v1783 = vpop.f32.mrf.mxu0
        %v1784 = vadd.f32 0.0, %v1783
        %v1785 = vpop.f32.mrf.mxu0
        %v1786 = vadd.f32 0.0, %v1785
        %1787 = vmatmul.bf16.gmra.mxu0 %v1719
        %v1788 = vpop.f32.mrf.mxu0
        %v1789 = vadd.f32 0.0, %v1788
        %v1790 = vpop.f32.mrf.mxu0
        %v1791 = vadd.f32 0.0, %v1790
        %1792 = vmatmul.bf16.gmra.mxu0 %v1722
        %v1793 = vpop.f32.mrf.mxu0
        %v1794 = vadd.f32 0.0, %v1793
        %v1795 = vpop.f32.mrf.mxu0
        %v1796 = vadd.f32 0.0, %v1795
        %1797 = vmatmul.bf16.gmra.mxu0 %v1725
        %v1798 = vpop.f32.mrf.mxu0
        %v1799 = vadd.f32 0.0, %v1798
        %v1800 = vpop.f32.mrf.mxu0
        %v1801 = vadd.f32 0.0, %v1800
        %1802 = vmatmul.bf16.gmra.mxu0 %v1728
        %v1803 = vpop.f32.mrf.mxu0
        %v1804 = vadd.f32 0.0, %v1803
        %v1805 = vpop.f32.mrf.mxu0
        %v1806 = vadd.f32 0.0, %v1805
        %1807 = vmatmul.bf16.gmra.mxu0 %v1731
        %v1808 = vpop.f32.mrf.mxu0
        %v1809 = vadd.f32 0.0, %v1808
        %v1810 = vpop.f32.mrf.mxu0
        %v1811 = vadd.f32 0.0, %v1810
        %1812 = vmatmul.bf16.gmra.mxu0 %v1734
        %v1813 = vpop.f32.mrf.mxu0
        %v1814 = vadd.f32 0.0, %v1813
        %v1815 = vpop.f32.mrf.mxu0
        %v1816 = vadd.f32 0.0, %v1815
        %1817 = vmatmul.bf16.gmra.mxu0 %v1737
        %v1818 = vpop.f32.mrf.mxu0
        %v1819 = vadd.f32 0.0, %v1818
        %v1820 = vpop.f32.mrf.mxu0
        %v1821 = vadd.f32 0.0, %v1820
        %1822 = vmatmul.bf16.gmra.mxu0 %v1740
        %v1823 = vpop.f32.mrf.mxu0
        %v1824 = vadd.f32 0.0, %v1823
        %v1825 = vpop.f32.mrf.mxu0
        %v1826 = vadd.f32 0.0, %v1825
        %1827 = vmatmul.bf16.gmra.mxu0 %v1743
        %v1828 = vpop.f32.mrf.mxu0
        %v1829 = vadd.f32 0.0, %v1828
        %v1830 = vpop.f32.mrf.mxu0
        %v1831 = vadd.f32 0.0, %v1830
        %1832 = vmatmul.bf16.gmra.mxu0 %v1746
        %v1833 = vpop.f32.mrf.mxu0
        %v1834 = vadd.f32 0.0, %v1833
        %v1835 = vpop.f32.mrf.mxu0
        %v1836 = vadd.f32 0.0, %v1835
        %1837 = vmatmul.bf16.gmra.mxu0 %v1749
        %v1838 = vpop.f32.mrf.mxu0
        %v1839 = vadd.f32 0.0, %v1838
        %v1840 = vpop.f32.mrf.mxu0
        %v1841 = vadd.f32 0.0, %v1840
        %1842 = vdwg.mxu0
        %v1843 = vadd.f32 %v1622, %v1764
        %v1844 = vadd.f32 %v1624, %v1766
        %v1845 = vadd.f32 %v1627, %v1769
        %v1846 = vadd.f32 %v1629, %v1771
        %v1847 = vadd.f32 %v1632, %v1774
        %v1848 = vadd.f32 %v1634, %v1776
        %v1849 = vadd.f32 %v1637, %v1779
        %v1850 = vadd.f32 %v1639, %v1781
        %v1851 = vadd.f32 %v1642, %v1784
        %v1852 = vadd.f32 %v1644, %v1786
        %v1853 = vadd.f32 %v1647, %v1789
        %v1854 = vadd.f32 %v1649, %v1791
        %v1855 = vadd.f32 %v1652, %v1794
        %v1856 = vadd.f32 %v1654, %v1796
        %v1857 = vadd.f32 %v1657, %v1799
        %v1858 = vadd.f32 %v1659, %v1801
        %v1859 = vadd.f32 %v1662, %v1804
        %v1860 = vadd.f32 %v1664, %v1806
        %v1861 = vadd.f32 %v1667, %v1809
        %v1862 = vadd.f32 %v1669, %v1811
        %v1863 = vadd.f32 %v1672, %v1814
        %v1864 = vadd.f32 %v1674, %v1816
        %v1865 = vadd.f32 %v1677, %v1819
        %v1866 = vadd.f32 %v1679, %v1821
        %v1867 = vadd.f32 %v1682, %v1824
        %v1868 = vadd.f32 %v1684, %v1826
        %v1869 = vadd.f32 %v1687, %v1829
        %v1870 = vadd.f32 %v1689, %v1831
        %v1871 = vadd.f32 %v1692, %v1834
        %v1872 = vadd.f32 %v1694, %v1836
        %v1873 = vadd.f32 %v1697, %v1839
        %v1874 = vadd.f32 %v1699, %v1841
        %s1875 = scalar_lea.vmem %s5, 6
        %v1876 = vld [vmem:[%s1875] sm:$0x3]
        %v1878 = vsel %vm1435, %v1247, 0
        %v1881 = vsel %vm1468, %v1876, 0
        %1883 = vmatpush.bf16.msra.mxu0 0
        %1884 = vmatpush.bf16.msra.mxu0 0
        %1885 = vmatpush.bf16.msra.mxu0 0
        %1886 = vmatpush.bf16.msra.mxu0 0
        %1887 = vmatpush.bf16.msra.mxu0 0
        %1888 = vmatpush.bf16.msra.mxu0 0
        %1889 = vmatpush.bf16.msra.mxu0 0
        %1890 = vmatpush.bf16.msra.mxu0 %v1881
        %1891 = vmatmul.bf16.gmra.mxu0 %v1565
        %v1892 = vpop.f32.mrf.mxu0
        %v1893 = vadd.f32 0.0, %v1892
        %v1894 = vpop.f32.mrf.mxu0
        %v1895 = vadd.f32 0.0, %v1894
        %1896 = vmatmul.bf16.gmra.mxu0 %v1568
        %v1897 = vpop.f32.mrf.mxu0
        %v1898 = vadd.f32 0.0, %v1897
        %v1899 = vpop.f32.mrf.mxu0
        %v1900 = vadd.f32 0.0, %v1899
        %1901 = vmatmul.bf16.gmra.mxu0 %v1571
        %v1902 = vpop.f32.mrf.mxu0
        %v1903 = vadd.f32 0.0, %v1902
        %v1904 = vpop.f32.mrf.mxu0
        %v1905 = vadd.f32 0.0, %v1904
        %1906 = vmatmul.bf16.gmra.mxu0 %v1574
        %v1907 = vpop.f32.mrf.mxu0
        %v1908 = vadd.f32 0.0, %v1907
        %v1909 = vpop.f32.mrf.mxu0
        %v1910 = vadd.f32 0.0, %v1909
        %1911 = vmatmul.bf16.gmra.mxu0 %v1577
        %v1912 = vpop.f32.mrf.mxu0
        %v1913 = vadd.f32 0.0, %v1912
        %v1914 = vpop.f32.mrf.mxu0
        %v1915 = vadd.f32 0.0, %v1914
        %1916 = vmatmul.bf16.gmra.mxu0 %v1580
        %v1917 = vpop.f32.mrf.mxu0
        %v1918 = vadd.f32 0.0, %v1917
        %v1919 = vpop.f32.mrf.mxu0
        %v1920 = vadd.f32 0.0, %v1919
        %1921 = vmatmul.bf16.gmra.mxu0 %v1583
        %v1922 = vpop.f32.mrf.mxu0
        %v1923 = vadd.f32 0.0, %v1922
        %v1924 = vpop.f32.mrf.mxu0
        %v1925 = vadd.f32 0.0, %v1924
        %1926 = vmatmul.bf16.gmra.mxu0 %v1586
        %v1927 = vpop.f32.mrf.mxu0
        %v1928 = vadd.f32 0.0, %v1927
        %v1929 = vpop.f32.mrf.mxu0
        %v1930 = vadd.f32 0.0, %v1929
        %1931 = vmatmul.bf16.gmra.mxu0 %v1589
        %v1932 = vpop.f32.mrf.mxu0
        %v1933 = vadd.f32 0.0, %v1932
        %v1934 = vpop.f32.mrf.mxu0
        %v1935 = vadd.f32 0.0, %v1934
        %1936 = vmatmul.bf16.gmra.mxu0 %v1592
        %v1937 = vpop.f32.mrf.mxu0
        %v1938 = vadd.f32 0.0, %v1937
        %v1939 = vpop.f32.mrf.mxu0
        %v1940 = vadd.f32 0.0, %v1939
        %1941 = vmatmul.bf16.gmra.mxu0 %v1595
        %v1942 = vpop.f32.mrf.mxu0
        %v1943 = vadd.f32 0.0, %v1942
        %v1944 = vpop.f32.mrf.mxu0
        %v1945 = vadd.f32 0.0, %v1944
        %1946 = vmatmul.bf16.gmra.mxu0 %v1598
        %v1947 = vpop.f32.mrf.mxu0
        %v1948 = vadd.f32 0.0, %v1947
        %v1949 = vpop.f32.mrf.mxu0
        %v1950 = vadd.f32 0.0, %v1949
        %1951 = vmatmul.bf16.gmra.mxu0 %v1601
        %v1952 = vpop.f32.mrf.mxu0
        %v1953 = vadd.f32 0.0, %v1952
        %v1954 = vpop.f32.mrf.mxu0
        %v1955 = vadd.f32 0.0, %v1954
        %1956 = vmatmul.bf16.gmra.mxu0 %v1604
        %v1957 = vpop.f32.mrf.mxu0
        %v1958 = vadd.f32 0.0, %v1957
        %v1959 = vpop.f32.mrf.mxu0
        %v1960 = vadd.f32 0.0, %v1959
        %1961 = vmatmul.bf16.gmra.mxu0 %v1607
        %v1962 = vpop.f32.mrf.mxu0
        %v1963 = vadd.f32 0.0, %v1962
        %v1964 = vpop.f32.mrf.mxu0
        %v1965 = vadd.f32 0.0, %v1964
        %1966 = vmatmul.bf16.gmra.mxu0 %v1878
        %v1967 = vpop.f32.mrf.mxu0
        %v1968 = vadd.f32 0.0, %v1967
        %v1969 = vpop.f32.mrf.mxu0
        %v1970 = vadd.f32 0.0, %v1969
        %1971 = vdwg.mxu0
        %v1972 = vadd.f32 %v1843, %v1893
        %v1973 = vadd.f32 %v1844, %v1895
        %v1974 = vadd.f32 %v1845, %v1898
        %v1975 = vadd.f32 %v1846, %v1900
        %v1976 = vadd.f32 %v1847, %v1903
        %v1977 = vadd.f32 %v1848, %v1905
        %v1978 = vadd.f32 %v1849, %v1908
        %v1979 = vadd.f32 %v1850, %v1910
        %v1980 = vadd.f32 %v1851, %v1913
        %v1981 = vadd.f32 %v1852, %v1915
        %v1982 = vadd.f32 %v1853, %v1918
        %v1983 = vadd.f32 %v1854, %v1920
        %v1984 = vadd.f32 %v1855, %v1923
        %v1985 = vadd.f32 %v1856, %v1925
        %v1986 = vadd.f32 %v1857, %v1928
        %v1987 = vadd.f32 %v1858, %v1930
        %v1988 = vadd.f32 %v1859, %v1933
        %v1989 = vadd.f32 %v1860, %v1935
        %v1990 = vadd.f32 %v1861, %v1938
        %v1991 = vadd.f32 %v1862, %v1940
        %v1992 = vadd.f32 %v1863, %v1943
        %v1993 = vadd.f32 %v1864, %v1945
        %v1994 = vadd.f32 %v1865, %v1948
        %v1995 = vadd.f32 %v1866, %v1950
        %v1996 = vadd.f32 %v1867, %v1953
        %v1997 = vadd.f32 %v1868, %v1955
        %v1998 = vadd.f32 %v1869, %v1958
        %v1999 = vadd.f32 %v1870, %v1960
        %v2000 = vadd.f32 %v1871, %v1963
        %v2001 = vadd.f32 %v1872, %v1965
        %v2002 = vadd.f32 %v1873, %v1968
        %v2003 = vadd.f32 %v1874, %v1970
        %s2004 = scalar_lea.vmem %s5, 8
        %v2005 = vld [vmem:[%s2004] sm:$0x3]
        %v2006 = vsel %vm1435, %v1082, 0
        %v2009 = vsel %vm1468, %v2005, 0
        %2011 = vmatpush.bf16.msra.mxu0 0
        %2012 = vmatpush.bf16.msra.mxu0 0
        %2013 = vmatpush.bf16.msra.mxu0 0
        %2014 = vmatpush.bf16.msra.mxu0 0
        %2015 = vmatpush.bf16.msra.mxu0 0
        %2016 = vmatpush.bf16.msra.mxu0 0
        %2017 = vmatpush.bf16.msra.mxu0 0
        %2018 = vmatpush.bf16.msra.mxu0 %v2009
        %2019 = vmatmul.bf16.gmra.mxu0 %v1438
        %v2020 = vpop.f32.mrf.mxu0
        %v2021 = vadd.f32 0.0, %v2020
        %v2022 = vpop.f32.mrf.mxu0
        %v2023 = vadd.f32 0.0, %v2022
        %2024 = vmatmul.bf16.gmra.mxu0 %v1440
        %v2025 = vpop.f32.mrf.mxu0
        %v2026 = vadd.f32 0.0, %v2025
        %v2027 = vpop.f32.mrf.mxu0
        %v2028 = vadd.f32 0.0, %v2027
        %2029 = vmatmul.bf16.gmra.mxu0 %v1442
        %v2030 = vpop.f32.mrf.mxu0
        %v2031 = vadd.f32 0.0, %v2030
        %v2032 = vpop.f32.mrf.mxu0
        %v2033 = vadd.f32 0.0, %v2032
        %2034 = vmatmul.bf16.gmra.mxu0 %v1444
        %v2035 = vpop.f32.mrf.mxu0
        %v2036 = vadd.f32 0.0, %v2035
        %v2037 = vpop.f32.mrf.mxu0
        %v2038 = vadd.f32 0.0, %v2037
        %2039 = vmatmul.bf16.gmra.mxu0 %v1446
        %v2040 = vpop.f32.mrf.mxu0
        %v2041 = vadd.f32 0.0, %v2040
        %v2042 = vpop.f32.mrf.mxu0
        %v2043 = vadd.f32 0.0, %v2042
        %2044 = vmatmul.bf16.gmra.mxu0 %v1448
        %v2045 = vpop.f32.mrf.mxu0
        %v2046 = vadd.f32 0.0, %v2045
        %v2047 = vpop.f32.mrf.mxu0
        %v2048 = vadd.f32 0.0, %v2047
        %2049 = vmatmul.bf16.gmra.mxu0 %v1450
        %v2050 = vpop.f32.mrf.mxu0
        %v2051 = vadd.f32 0.0, %v2050
        %v2052 = vpop.f32.mrf.mxu0
        %v2053 = vadd.f32 0.0, %v2052
        %2054 = vmatmul.bf16.gmra.mxu0 %v1452
        %v2055 = vpop.f32.mrf.mxu0
        %v2056 = vadd.f32 0.0, %v2055
        %v2057 = vpop.f32.mrf.mxu0
        %v2058 = vadd.f32 0.0, %v2057
        %2059 = vmatmul.bf16.gmra.mxu0 %v1454
        %v2060 = vpop.f32.mrf.mxu0
        %v2061 = vadd.f32 0.0, %v2060
        %v2062 = vpop.f32.mrf.mxu0
        %v2063 = vadd.f32 0.0, %v2062
        %2064 = vmatmul.bf16.gmra.mxu0 %v1456
        %v2065 = vpop.f32.mrf.mxu0
        %v2066 = vadd.f32 0.0, %v2065
        %v2067 = vpop.f32.mrf.mxu0
        %v2068 = vadd.f32 0.0, %v2067
        %2069 = vmatmul.bf16.gmra.mxu0 %v1458
        %v2070 = vpop.f32.mrf.mxu0
        %v2071 = vadd.f32 0.0, %v2070
        %v2072 = vpop.f32.mrf.mxu0
        %v2073 = vadd.f32 0.0, %v2072
        %2074 = vmatmul.bf16.gmra.mxu0 %v1460
        %v2075 = vpop.f32.mrf.mxu0
        %v2076 = vadd.f32 0.0, %v2075
        %v2077 = vpop.f32.mrf.mxu0
        %v2078 = vadd.f32 0.0, %v2077
        %2079 = vmatmul.bf16.gmra.mxu0 %v1462
        %v2080 = vpop.f32.mrf.mxu0
        %v2081 = vadd.f32 0.0, %v2080
        %v2082 = vpop.f32.mrf.mxu0
        %v2083 = vadd.f32 0.0, %v2082
        %2084 = vmatmul.bf16.gmra.mxu0 %v1464
        %v2085 = vpop.f32.mrf.mxu0
        %v2086 = vadd.f32 0.0, %v2085
        %v2087 = vpop.f32.mrf.mxu0
        %v2088 = vadd.f32 0.0, %v2087
        %2089 = vmatmul.bf16.gmra.mxu0 %v1466
        %v2090 = vpop.f32.mrf.mxu0
        %v2091 = vadd.f32 0.0, %v2090
        %v2092 = vpop.f32.mrf.mxu0
        %v2093 = vadd.f32 0.0, %v2092
        %2094 = vmatmul.bf16.gmra.mxu0 %v2006
        %v2095 = vpop.f32.mrf.mxu0
        %v2096 = vadd.f32 0.0, %v2095
        %v2097 = vpop.f32.mrf.mxu0
        %v2098 = vadd.f32 0.0, %v2097
        %2099 = vdwg.mxu0
        %v2100 = vadd.f32 %v1972, %v2021
        %v2101 = vadd.f32 %v1973, %v2023
        %v2102 = vadd.f32 %v1974, %v2026
        %v2103 = vadd.f32 %v1975, %v2028
        %v2104 = vadd.f32 %v1976, %v2031
        %v2105 = vadd.f32 %v1977, %v2033
        %v2106 = vadd.f32 %v1978, %v2036
        %v2107 = vadd.f32 %v1979, %v2038
        %v2108 = vadd.f32 %v1980, %v2041
        %v2109 = vadd.f32 %v1981, %v2043
        %v2110 = vadd.f32 %v1982, %v2046
        %v2111 = vadd.f32 %v1983, %v2048
        %v2112 = vadd.f32 %v1984, %v2051
        %v2113 = vadd.f32 %v1985, %v2053
        %v2114 = vadd.f32 %v1986, %v2056
        %v2115 = vadd.f32 %v1987, %v2058
        %v2116 = vadd.f32 %v1988, %v2061
        %v2117 = vadd.f32 %v1989, %v2063
        %v2118 = vadd.f32 %v1990, %v2066
        %v2119 = vadd.f32 %v1991, %v2068
        %v2120 = vadd.f32 %v1992, %v2071
        %v2121 = vadd.f32 %v1993, %v2073
        %v2122 = vadd.f32 %v1994, %v2076
        %v2123 = vadd.f32 %v1995, %v2078
        %v2124 = vadd.f32 %v1996, %v2081
        %v2125 = vadd.f32 %v1997, %v2083
        %v2126 = vadd.f32 %v1998, %v2086
        %v2127 = vadd.f32 %v1999, %v2088
        %v2128 = vadd.f32 %v2000, %v2091
        %v2129 = vadd.f32 %v2001, %v2093
        %v2130 = vadd.f32 %v2002, %v2096
        %v2131 = vadd.f32 %v2003, %v2098
        %s2132 = scalar_lea.vmem %s5, 10
        %v2133 = vld [vmem:[%s2132] sm:$0x3]
        %v2135 = vsel %vm1435, %v1430, 0
        %v2138 = vsel %vm1468, %v2133, 0
        %2140 = vmatpush.bf16.msra.mxu0 0
        %2141 = vmatpush.bf16.msra.mxu0 0
        %2142 = vmatpush.bf16.msra.mxu0 0
        %2143 = vmatpush.bf16.msra.mxu0 0
        %2144 = vmatpush.bf16.msra.mxu0 0
        %2145 = vmatpush.bf16.msra.mxu0 0
        %2146 = vmatpush.bf16.msra.mxu0 0
        %2147 = vmatpush.bf16.msra.mxu0 %v2138
        %2148 = vmatmul.bf16.gmra.mxu0 %v1707
        %v2149 = vpop.f32.mrf.mxu0
        %v2150 = vadd.f32 0.0, %v2149
        %v2151 = vpop.f32.mrf.mxu0
        %v2152 = vadd.f32 0.0, %v2151
        %2153 = vmatmul.bf16.gmra.mxu0 %v1710
        %v2154 = vpop.f32.mrf.mxu0
        %v2155 = vadd.f32 0.0, %v2154
        %v2156 = vpop.f32.mrf.mxu0
        %v2157 = vadd.f32 0.0, %v2156
        %2158 = vmatmul.bf16.gmra.mxu0 %v1713
        %v2159 = vpop.f32.mrf.mxu0
        %v2160 = vadd.f32 0.0, %v2159
        %v2161 = vpop.f32.mrf.mxu0
        %v2162 = vadd.f32 0.0, %v2161
        %2163 = vmatmul.bf16.gmra.mxu0 %v1716
        %v2164 = vpop.f32.mrf.mxu0
        %v2165 = vadd.f32 0.0, %v2164
        %v2166 = vpop.f32.mrf.mxu0
        %v2167 = vadd.f32 0.0, %v2166
        %2168 = vmatmul.bf16.gmra.mxu0 %v1719
        %v2169 = vpop.f32.mrf.mxu0
        %v2170 = vadd.f32 0.0, %v2169
        %v2171 = vpop.f32.mrf.mxu0
        %v2172 = vadd.f32 0.0, %v2171
        %2173 = vmatmul.bf16.gmra.mxu0 %v1722
        %v2174 = vpop.f32.mrf.mxu0
        %v2175 = vadd.f32 0.0, %v2174
        %v2176 = vpop.f32.mrf.mxu0
        %v2177 = vadd.f32 0.0, %v2176
        %2178 = vmatmul.bf16.gmra.mxu0 %v1725
        %v2179 = vpop.f32.mrf.mxu0
        %v2180 = vadd.f32 0.0, %v2179
        %v2181 = vpop.f32.mrf.mxu0
        %v2182 = vadd.f32 0.0, %v2181
        %2183 = vmatmul.bf16.gmra.mxu0 %v1728
        %v2184 = vpop.f32.mrf.mxu0
        %v2185 = vadd.f32 0.0, %v2184
        %v2186 = vpop.f32.mrf.mxu0
        %v2187 = vadd.f32 0.0, %v2186
        %2188 = vmatmul.bf16.gmra.mxu0 %v1731
        %v2189 = vpop.f32.mrf.mxu0
        %v2190 = vadd.f32 0.0, %v2189
        %v2191 = vpop.f32.mrf.mxu0
        %v2192 = vadd.f32 0.0, %v2191
        %2193 = vmatmul.bf16.gmra.mxu0 %v1734
        %v2194 = vpop.f32.mrf.mxu0
        %v2195 = vadd.f32 0.0, %v2194
        %v2196 = vpop.f32.mrf.mxu0
        %v2197 = vadd.f32 0.0, %v2196
        %2198 = vmatmul.bf16.gmra.mxu0 %v1737
        %v2199 = vpop.f32.mrf.mxu0
        %v2200 = vadd.f32 0.0, %v2199
        %v2201 = vpop.f32.mrf.mxu0
        %v2202 = vadd.f32 0.0, %v2201
        %2203 = vmatmul.bf16.gmra.mxu0 %v1740
        %v2204 = vpop.f32.mrf.mxu0
        %v2205 = vadd.f32 0.0, %v2204
        %v2206 = vpop.f32.mrf.mxu0
        %v2207 = vadd.f32 0.0, %v2206
        %2208 = vmatmul.bf16.gmra.mxu0 %v1743
        %v2209 = vpop.f32.mrf.mxu0
        %v2210 = vadd.f32 0.0, %v2209
        %v2211 = vpop.f32.mrf.mxu0
        %v2212 = vadd.f32 0.0, %v2211
        %2213 = vmatmul.bf16.gmra.mxu0 %v1746
        %v2214 = vpop.f32.mrf.mxu0
        %v2215 = vadd.f32 0.0, %v2214
        %v2216 = vpop.f32.mrf.mxu0
        %v2217 = vadd.f32 0.0, %v2216
        %2218 = vmatmul.bf16.gmra.mxu0 %v1749
        %v2219 = vpop.f32.mrf.mxu0
        %v2220 = vadd.f32 0.0, %v2219
        %v2221 = vpop.f32.mrf.mxu0
        %v2222 = vadd.f32 0.0, %v2221
        %2223 = vmatmul.bf16.gmra.mxu0 %v2135
        %v2224 = vpop.f32.mrf.mxu0
        %v2225 = vadd.f32 0.0, %v2224
        %v2226 = vpop.f32.mrf.mxu0
        %v2227 = vadd.f32 0.0, %v2226
        %2228 = vdwg.mxu0
        %v2229 = vadd.f32 %v2100, %v2150
        %v2230 = vadd.f32 %v2101, %v2152
        %v2231 = vadd.f32 %v2102, %v2155
        %v2232 = vadd.f32 %v2103, %v2157
        %v2233 = vadd.f32 %v2104, %v2160
        %v2234 = vadd.f32 %v2105, %v2162
        %v2235 = vadd.f32 %v2106, %v2165
        %v2236 = vadd.f32 %v2107, %v2167
        %v2237 = vadd.f32 %v2108, %v2170
        %v2238 = vadd.f32 %v2109, %v2172
        %v2239 = vadd.f32 %v2110, %v2175
        %v2240 = vadd.f32 %v2111, %v2177
        %v2241 = vadd.f32 %v2112, %v2180
        %v2242 = vadd.f32 %v2113, %v2182
        %v2243 = vadd.f32 %v2114, %v2185
        %v2244 = vadd.f32 %v2115, %v2187
        %v2245 = vadd.f32 %v2116, %v2190
        %v2246 = vadd.f32 %v2117, %v2192
        %v2247 = vadd.f32 %v2118, %v2195
        %v2248 = vadd.f32 %v2119, %v2197
        %v2249 = vadd.f32 %v2120, %v2200
        %v2250 = vadd.f32 %v2121, %v2202
        %v2251 = vadd.f32 %v2122, %v2205
        %v2252 = vadd.f32 %v2123, %v2207
        %v2253 = vadd.f32 %v2124, %v2210
        %v2254 = vadd.f32 %v2125, %v2212
        %v2255 = vadd.f32 %v2126, %v2215
        %v2256 = vadd.f32 %v2127, %v2217
        %v2257 = vadd.f32 %v2128, %v2220
        %v2258 = vadd.f32 %v2129, %v2222
        %v2259 = vadd.f32 %v2130, %v2225
        %v2260 = vadd.f32 %v2131, %v2227
        %s2261 = scalar_lea.vmem %s5, 12
        %v2262 = vld [vmem:[%s2261] sm:$0x3]
        %v2264 = vsel %vm1435, %v1248, 0
        %v2267 = vsel %vm1468, %v2262, 0
        %2269 = vmatpush.bf16.msra.mxu0 0
        %2270 = vmatpush.bf16.msra.mxu0 0
        %2271 = vmatpush.bf16.msra.mxu0 0
        %2272 = vmatpush.bf16.msra.mxu0 0
        %2273 = vmatpush.bf16.msra.mxu0 0
        %2274 = vmatpush.bf16.msra.mxu0 0
        %2275 = vmatpush.bf16.msra.mxu0 0
        %2276 = vmatpush.bf16.msra.mxu0 %v2267
        %2277 = vmatmul.bf16.gmra.mxu0 %v1568
        %v2278 = vpop.f32.mrf.mxu0
        %v2279 = vadd.f32 0.0, %v2278
        %v2280 = vpop.f32.mrf.mxu0
        %v2281 = vadd.f32 0.0, %v2280
        %2282 = vmatmul.bf16.gmra.mxu0 %v1571
        %v2283 = vpop.f32.mrf.mxu0
        %v2284 = vadd.f32 0.0, %v2283
        %v2285 = vpop.f32.mrf.mxu0
        %v2286 = vadd.f32 0.0, %v2285
        %2287 = vmatmul.bf16.gmra.mxu0 %v1574
        %v2288 = vpop.f32.mrf.mxu0
        %v2289 = vadd.f32 0.0, %v2288
        %v2290 = vpop.f32.mrf.mxu0
        %v2291 = vadd.f32 0.0, %v2290
        %2292 = vmatmul.bf16.gmra.mxu0 %v1577
        %v2293 = vpop.f32.mrf.mxu0
        %v2294 = vadd.f32 0.0, %v2293
        %v2295 = vpop.f32.mrf.mxu0
        %v2296 = vadd.f32 0.0, %v2295
        %2297 = vmatmul.bf16.gmra.mxu0 %v1580
        %v2298 = vpop.f32.mrf.mxu0
        %v2299 = vadd.f32 0.0, %v2298
        %v2300 = vpop.f32.mrf.mxu0
        %v2301 = vadd.f32 0.0, %v2300
        %2302 = vmatmul.bf16.gmra.mxu0 %v1583
        %v2303 = vpop.f32.mrf.mxu0
        %v2304 = vadd.f32 0.0, %v2303
        %v2305 = vpop.f32.mrf.mxu0
        %v2306 = vadd.f32 0.0, %v2305
        %2307 = vmatmul.bf16.gmra.mxu0 %v1586
        %v2308 = vpop.f32.mrf.mxu0
        %v2309 = vadd.f32 0.0, %v2308
        %v2310 = vpop.f32.mrf.mxu0
        %v2311 = vadd.f32 0.0, %v2310
        %2312 = vmatmul.bf16.gmra.mxu0 %v1589
        %v2313 = vpop.f32.mrf.mxu0
        %v2314 = vadd.f32 0.0, %v2313
        %v2315 = vpop.f32.mrf.mxu0
        %v2316 = vadd.f32 0.0, %v2315
        %2317 = vmatmul.bf16.gmra.mxu0 %v1592
        %v2318 = vpop.f32.mrf.mxu0
        %v2319 = vadd.f32 0.0, %v2318
        %v2320 = vpop.f32.mrf.mxu0
        %v2321 = vadd.f32 0.0, %v2320
        %2322 = vmatmul.bf16.gmra.mxu0 %v1595
        %v2323 = vpop.f32.mrf.mxu0
        %v2324 = vadd.f32 0.0, %v2323
        %v2325 = vpop.f32.mrf.mxu0
        %v2326 = vadd.f32 0.0, %v2325
        %2327 = vmatmul.bf16.gmra.mxu0 %v1598
        %v2328 = vpop.f32.mrf.mxu0
        %v2329 = vadd.f32 0.0, %v2328
        %v2330 = vpop.f32.mrf.mxu0
        %v2331 = vadd.f32 0.0, %v2330
        %2332 = vmatmul.bf16.gmra.mxu0 %v1601
        %v2333 = vpop.f32.mrf.mxu0
        %v2334 = vadd.f32 0.0, %v2333
        %v2335 = vpop.f32.mrf.mxu0
        %v2336 = vadd.f32 0.0, %v2335
        %2337 = vmatmul.bf16.gmra.mxu0 %v1604
        %v2338 = vpop.f32.mrf.mxu0
        %v2339 = vadd.f32 0.0, %v2338
        %v2340 = vpop.f32.mrf.mxu0
        %v2341 = vadd.f32 0.0, %v2340
        %2342 = vmatmul.bf16.gmra.mxu0 %v1607
        %v2343 = vpop.f32.mrf.mxu0
        %v2344 = vadd.f32 0.0, %v2343
        %v2345 = vpop.f32.mrf.mxu0
        %v2346 = vadd.f32 0.0, %v2345
        %2347 = vmatmul.bf16.gmra.mxu0 %v1878
        %v2348 = vpop.f32.mrf.mxu0
        %v2349 = vadd.f32 0.0, %v2348
        %v2350 = vpop.f32.mrf.mxu0
        %v2351 = vadd.f32 0.0, %v2350
        %2352 = vmatmul.bf16.gmra.mxu0 %v2264
        %v2353 = vpop.f32.mrf.mxu0
        %v2354 = vadd.f32 0.0, %v2353
        %v2355 = vpop.f32.mrf.mxu0
        %v2356 = vadd.f32 0.0, %v2355
        %2357 = vdwg.mxu0
        %v2358 = vadd.f32 %v2229, %v2279
        %v2359 = vadd.f32 %v2230, %v2281
        %v2360 = vadd.f32 %v2231, %v2284
        %v2361 = vadd.f32 %v2232, %v2286
        %v2362 = vadd.f32 %v2233, %v2289
        %v2363 = vadd.f32 %v2234, %v2291
        %v2364 = vadd.f32 %v2235, %v2294
        %v2365 = vadd.f32 %v2236, %v2296
        %v2366 = vadd.f32 %v2237, %v2299
        %v2367 = vadd.f32 %v2238, %v2301
        %v2368 = vadd.f32 %v2239, %v2304
        %v2369 = vadd.f32 %v2240, %v2306
        %v2370 = vadd.f32 %v2241, %v2309
        %v2371 = vadd.f32 %v2242, %v2311
        %v2372 = vadd.f32 %v2243, %v2314
        %v2373 = vadd.f32 %v2244, %v2316
        %v2374 = vadd.f32 %v2245, %v2319
        %v2375 = vadd.f32 %v2246, %v2321
        %v2376 = vadd.f32 %v2247, %v2324
        %v2377 = vadd.f32 %v2248, %v2326
        %v2378 = vadd.f32 %v2249, %v2329
        %v2379 = vadd.f32 %v2250, %v2331
        %v2380 = vadd.f32 %v2251, %v2334
        %v2381 = vadd.f32 %v2252, %v2336
        %v2382 = vadd.f32 %v2253, %v2339
        %v2383 = vadd.f32 %v2254, %v2341
        %v2384 = vadd.f32 %v2255, %v2344
        %v2385 = vadd.f32 %v2256, %v2346
        %v2386 = vadd.f32 %v2257, %v2349
        %v2387 = vadd.f32 %v2258, %v2351
        %v2388 = vadd.f32 %v2259, %v2354
        %v2389 = vadd.f32 %v2260, %v2356
        %s2390 = scalar_lea.vmem %s5, 14
        %v2391 = vld [vmem:[%s2390] sm:$0x3]
        %v2392 = vsel %vm1435, %v1083, 0
        %v2395 = vsel %vm1468, %v2391, 0
        %2397 = vmatpush.bf16.msra.mxu0 0
        %2398 = vmatpush.bf16.msra.mxu0 0
        %2399 = vmatpush.bf16.msra.mxu0 0
        %2400 = vmatpush.bf16.msra.mxu0 0
        %2401 = vmatpush.bf16.msra.mxu0 0
        %2402 = vmatpush.bf16.msra.mxu0 0
        %2403 = vmatpush.bf16.msra.mxu0 0
        %2404 = vmatpush.bf16.msra.mxu0 %v2395
        %2405 = vmatmul.bf16.gmra.mxu0 %v1440
        %v2406 = vpop.f32.mrf.mxu0
        %v2407 = vadd.f32 0.0, %v2406
        %v2408 = vpop.f32.mrf.mxu0
        %v2409 = vadd.f32 0.0, %v2408
        %2410 = vmatmul.bf16.gmra.mxu0 %v1442
        %v2411 = vpop.f32.mrf.mxu0
        %v2412 = vadd.f32 0.0, %v2411
        %v2413 = vpop.f32.mrf.mxu0
        %v2414 = vadd.f32 0.0, %v2413
        %2415 = vmatmul.bf16.gmra.mxu0 %v1444
        %v2416 = vpop.f32.mrf.mxu0
        %v2417 = vadd.f32 0.0, %v2416
        %v2418 = vpop.f32.mrf.mxu0
        %v2419 = vadd.f32 0.0, %v2418
        %2420 = vmatmul.bf16.gmra.mxu0 %v1446
        %v2421 = vpop.f32.mrf.mxu0
        %v2422 = vadd.f32 0.0, %v2421
        %v2423 = vpop.f32.mrf.mxu0
        %v2424 = vadd.f32 0.0, %v2423
        %2425 = vmatmul.bf16.gmra.mxu0 %v1448
        %v2426 = vpop.f32.mrf.mxu0
        %v2427 = vadd.f32 0.0, %v2426
        %v2428 = vpop.f32.mrf.mxu0
        %v2429 = vadd.f32 0.0, %v2428
        %2430 = vmatmul.bf16.gmra.mxu0 %v1450
        %v2431 = vpop.f32.mrf.mxu0
        %v2432 = vadd.f32 0.0, %v2431
        %v2433 = vpop.f32.mrf.mxu0
        %v2434 = vadd.f32 0.0, %v2433
        %2435 = vmatmul.bf16.gmra.mxu0 %v1452
        %v2436 = vpop.f32.mrf.mxu0
        %v2437 = vadd.f32 0.0, %v2436
        %v2438 = vpop.f32.mrf.mxu0
        %v2439 = vadd.f32 0.0, %v2438
        %2440 = vmatmul.bf16.gmra.mxu0 %v1454
        %v2441 = vpop.f32.mrf.mxu0
        %v2442 = vadd.f32 0.0, %v2441
        %v2443 = vpop.f32.mrf.mxu0
        %v2444 = vadd.f32 0.0, %v2443
        %2445 = vmatmul.bf16.gmra.mxu0 %v1456
        %v2446 = vpop.f32.mrf.mxu0
        %v2447 = vadd.f32 0.0, %v2446
        %v2448 = vpop.f32.mrf.mxu0
        %v2449 = vadd.f32 0.0, %v2448
        %2450 = vmatmul.bf16.gmra.mxu0 %v1458
        %v2451 = vpop.f32.mrf.mxu0
        %v2452 = vadd.f32 0.0, %v2451
        %v2453 = vpop.f32.mrf.mxu0
        %v2454 = vadd.f32 0.0, %v2453
        %2455 = vmatmul.bf16.gmra.mxu0 %v1460
        %v2456 = vpop.f32.mrf.mxu0
        %v2457 = vadd.f32 0.0, %v2456
        %v2458 = vpop.f32.mrf.mxu0
        %v2459 = vadd.f32 0.0, %v2458
        %2460 = vmatmul.bf16.gmra.mxu0 %v1462
        %v2461 = vpop.f32.mrf.mxu0
        %v2462 = vadd.f32 0.0, %v2461
        %v2463 = vpop.f32.mrf.mxu0
        %v2464 = vadd.f32 0.0, %v2463
        %2465 = vmatmul.bf16.gmra.mxu0 %v1464
        %v2466 = vpop.f32.mrf.mxu0
        %v2467 = vadd.f32 0.0, %v2466
        %v2468 = vpop.f32.mrf.mxu0
        %v2469 = vadd.f32 0.0, %v2468
        %2470 = vmatmul.bf16.gmra.mxu0 %v1466
        %v2471 = vpop.f32.mrf.mxu0
        %v2472 = vadd.f32 0.0, %v2471
        %v2473 = vpop.f32.mrf.mxu0
        %v2474 = vadd.f32 0.0, %v2473
        %2475 = vmatmul.bf16.gmra.mxu0 %v2006
        %v2476 = vpop.f32.mrf.mxu0
        %v2477 = vadd.f32 0.0, %v2476
        %v2478 = vpop.f32.mrf.mxu0
        %v2479 = vadd.f32 0.0, %v2478
        %2480 = vmatmul.bf16.gmra.mxu0 %v2392
        %v2481 = vpop.f32.mrf.mxu0
        %v2482 = vadd.f32 0.0, %v2481
        %v2483 = vpop.f32.mrf.mxu0
        %v2484 = vadd.f32 0.0, %v2483
        %2485 = vdwg.mxu0
        %v2486 = vadd.f32 %v2358, %v2407
        %v2487 = vadd.f32 %v2359, %v2409
        %v2488 = vadd.f32 %v2360, %v2412
        %v2489 = vadd.f32 %v2361, %v2414
        %v2490 = vadd.f32 %v2362, %v2417
        %v2491 = vadd.f32 %v2363, %v2419
        %v2492 = vadd.f32 %v2364, %v2422
        %v2493 = vadd.f32 %v2365, %v2424
        %v2494 = vadd.f32 %v2366, %v2427
        %v2495 = vadd.f32 %v2367, %v2429
        %v2496 = vadd.f32 %v2368, %v2432
        %v2497 = vadd.f32 %v2369, %v2434
        %v2498 = vadd.f32 %v2370, %v2437
        %v2499 = vadd.f32 %v2371, %v2439
        %v2500 = vadd.f32 %v2372, %v2442
        %v2501 = vadd.f32 %v2373, %v2444
        %v2502 = vadd.f32 %v2374, %v2447
        %v2503 = vadd.f32 %v2375, %v2449
        %v2504 = vadd.f32 %v2376, %v2452
        %v2505 = vadd.f32 %v2377, %v2454
        %v2506 = vadd.f32 %v2378, %v2457
        %v2507 = vadd.f32 %v2379, %v2459
        %v2508 = vadd.f32 %v2380, %v2462
        %v2509 = vadd.f32 %v2381, %v2464
        %v2510 = vadd.f32 %v2382, %v2467
        %v2511 = vadd.f32 %v2383, %v2469
        %v2512 = vadd.f32 %v2384, %v2472
        %v2513 = vadd.f32 %v2385, %v2474
        %v2514 = vadd.f32 %v2386, %v2477
        %v2515 = vadd.f32 %v2387, %v2479
        %v2516 = vadd.f32 %v2388, %v2482
        %v2517 = vadd.f32 %v2389, %v2484
        %s2518 = scalar_lea.vmem %s5, 16
        %v2519 = vld [vmem:[%s2518] sm:$0x3]
        %v2521 = vsel %vm1435, %v1431, 0
        %v2524 = vsel %vm1468, %v2519, 0
        %2526 = vmatpush.bf16.msra.mxu0 0
        %2527 = vmatpush.bf16.msra.mxu0 0
        %2528 = vmatpush.bf16.msra.mxu0 0
        %2529 = vmatpush.bf16.msra.mxu0 0
        %2530 = vmatpush.bf16.msra.mxu0 0
        %2531 = vmatpush.bf16.msra.mxu0 0
        %2532 = vmatpush.bf16.msra.mxu0 0
        %2533 = vmatpush.bf16.msra.mxu0 %v2524
        %2534 = vmatmul.bf16.gmra.mxu0 %v1710
        %v2535 = vpop.f32.mrf.mxu0
        %v2536 = vadd.f32 0.0, %v2535
        %v2537 = vpop.f32.mrf.mxu0
        %v2538 = vadd.f32 0.0, %v2537
        %2539 = vmatmul.bf16.gmra.mxu0 %v1713
        %v2540 = vpop.f32.mrf.mxu0
        %v2541 = vadd.f32 0.0, %v2540
        %v2542 = vpop.f32.mrf.mxu0
        %v2543 = vadd.f32 0.0, %v2542
        %2544 = vmatmul.bf16.gmra.mxu0 %v1716
        %v2545 = vpop.f32.mrf.mxu0
        %v2546 = vadd.f32 0.0, %v2545
        %v2547 = vpop.f32.mrf.mxu0
        %v2548 = vadd.f32 0.0, %v2547
        %2549 = vmatmul.bf16.gmra.mxu0 %v1719
        %v2550 = vpop.f32.mrf.mxu0
        %v2551 = vadd.f32 0.0, %v2550
        %v2552 = vpop.f32.mrf.mxu0
        %v2553 = vadd.f32 0.0, %v2552
        %2554 = vmatmul.bf16.gmra.mxu0 %v1722
        %v2555 = vpop.f32.mrf.mxu0
        %v2556 = vadd.f32 0.0, %v2555
        %v2557 = vpop.f32.mrf.mxu0
        %v2558 = vadd.f32 0.0, %v2557
        %2559 = vmatmul.bf16.gmra.mxu0 %v1725
        %v2560 = vpop.f32.mrf.mxu0
        %v2561 = vadd.f32 0.0, %v2560
        %v2562 = vpop.f32.mrf.mxu0
        %v2563 = vadd.f32 0.0, %v2562
        %2564 = vmatmul.bf16.gmra.mxu0 %v1728
        %v2565 = vpop.f32.mrf.mxu0
        %v2566 = vadd.f32 0.0, %v2565
        %v2567 = vpop.f32.mrf.mxu0
        %v2568 = vadd.f32 0.0, %v2567
        %2569 = vmatmul.bf16.gmra.mxu0 %v1731
        %v2570 = vpop.f32.mrf.mxu0
        %v2571 = vadd.f32 0.0, %v2570
        %v2572 = vpop.f32.mrf.mxu0
        %v2573 = vadd.f32 0.0, %v2572
        %2574 = vmatmul.bf16.gmra.mxu0 %v1734
        %v2575 = vpop.f32.mrf.mxu0
        %v2576 = vadd.f32 0.0, %v2575
        %v2577 = vpop.f32.mrf.mxu0
        %v2578 = vadd.f32 0.0, %v2577
        %2579 = vmatmul.bf16.gmra.mxu0 %v1737
        %v2580 = vpop.f32.mrf.mxu0
        %v2581 = vadd.f32 0.0, %v2580
        %v2582 = vpop.f32.mrf.mxu0
        %v2583 = vadd.f32 0.0, %v2582
        %2584 = vmatmul.bf16.gmra.mxu0 %v1740
        %v2585 = vpop.f32.mrf.mxu0
        %v2586 = vadd.f32 0.0, %v2585
        %v2587 = vpop.f32.mrf.mxu0
        %v2588 = vadd.f32 0.0, %v2587
        %2589 = vmatmul.bf16.gmra.mxu0 %v1743
        %v2590 = vpop.f32.mrf.mxu0
        %v2591 = vadd.f32 0.0, %v2590
        %v2592 = vpop.f32.mrf.mxu0
        %v2593 = vadd.f32 0.0, %v2592
        %2594 = vmatmul.bf16.gmra.mxu0 %v1746
        %v2595 = vpop.f32.mrf.mxu0
        %v2596 = vadd.f32 0.0, %v2595
        %v2597 = vpop.f32.mrf.mxu0
        %v2598 = vadd.f32 0.0, %v2597
        %2599 = vmatmul.bf16.gmra.mxu0 %v1749
        %v2600 = vpop.f32.mrf.mxu0
        %v2601 = vadd.f32 0.0, %v2600
        %v2602 = vpop.f32.mrf.mxu0
        %v2603 = vadd.f32 0.0, %v2602
        %2604 = vmatmul.bf16.gmra.mxu0 %v2135
        %v2605 = vpop.f32.mrf.mxu0
        %v2606 = vadd.f32 0.0, %v2605
        %v2607 = vpop.f32.mrf.mxu0
        %v2608 = vadd.f32 0.0, %v2607
        %2609 = vmatmul.bf16.gmra.mxu0 %v2521
        %v2610 = vpop.f32.mrf.mxu0
        %v2611 = vadd.f32 0.0, %v2610
        %v2612 = vpop.f32.mrf.mxu0
        %v2613 = vadd.f32 0.0, %v2612
        %2614 = vdwg.mxu0
        %v2615 = vadd.f32 %v2486, %v2536
        %v2616 = vadd.f32 %v2487, %v2538
        %v2617 = vadd.f32 %v2488, %v2541
        %v2618 = vadd.f32 %v2489, %v2543
        %v2619 = vadd.f32 %v2490, %v2546
        %v2620 = vadd.f32 %v2491, %v2548
        %v2621 = vadd.f32 %v2492, %v2551
        %v2622 = vadd.f32 %v2493, %v2553
        %v2623 = vadd.f32 %v2494, %v2556
        %v2624 = vadd.f32 %v2495, %v2558
        %v2625 = vadd.f32 %v2496, %v2561
        %v2626 = vadd.f32 %v2497, %v2563
        %v2627 = vadd.f32 %v2498, %v2566
        %v2628 = vadd.f32 %v2499, %v2568
        %v2629 = vadd.f32 %v2500, %v2571
        %v2630 = vadd.f32 %v2501, %v2573
        %v2631 = vadd.f32 %v2502, %v2576
        %v2632 = vadd.f32 %v2503, %v2578
        %v2633 = vadd.f32 %v2504, %v2581
        %v2634 = vadd.f32 %v2505, %v2583
        %v2635 = vadd.f32 %v2506, %v2586
        %v2636 = vadd.f32 %v2507, %v2588
        %v2637 = vadd.f32 %v2508, %v2591
        %v2638 = vadd.f32 %v2509, %v2593
        %v2639 = vadd.f32 %v2510, %v2596
        %v2640 = vadd.f32 %v2511, %v2598
        %v2641 = vadd.f32 %v2512, %v2601
        %v2642 = vadd.f32 %v2513, %v2603
        %v2643 = vadd.f32 %v2514, %v2606
        %v2644 = vadd.f32 %v2515, %v2608
        %v2645 = vadd.f32 %v2516, %v2611
        %v2646 = vadd.f32 %v2517, %v2613
        %v2647 = vld [vmem:[%s6] sm:$0x1]
        %v2649 = vperm.slane %v2647, 0
        %v2651 = vadd.f32 %v2615, %v2649
        %v2652 = vadd.f32 %v2616, %v2649
        %v2653 = vadd.f32 %v2617, %v2649
        %v2654 = vadd.f32 %v2618, %v2649
        %v2655 = vadd.f32 %v2619, %v2649
        %v2656 = vadd.f32 %v2620, %v2649
        %v2657 = vadd.f32 %v2621, %v2649
        %v2658 = vadd.f32 %v2622, %v2649
        %v2659 = vadd.f32 %v2623, %v2649
        %v2660 = vadd.f32 %v2624, %v2649
        %v2661 = vadd.f32 %v2625, %v2649
        %v2662 = vadd.f32 %v2626, %v2649
        %v2663 = vadd.f32 %v2627, %v2649
        %v2664 = vadd.f32 %v2628, %v2649
        %v2665 = vadd.f32 %v2629, %v2649
        %v2666 = vadd.f32 %v2630, %v2649
        %v2667 = vadd.f32 %v2631, %v2649
        %v2668 = vadd.f32 %v2632, %v2649
        %v2669 = vadd.f32 %v2633, %v2649
        %v2670 = vadd.f32 %v2634, %v2649
        %v2671 = vadd.f32 %v2635, %v2649
        %v2672 = vadd.f32 %v2636, %v2649
        %v2673 = vadd.f32 %v2637, %v2649
        %v2674 = vadd.f32 %v2638, %v2649
        %v2675 = vadd.f32 %v2639, %v2649
        %v2676 = vadd.f32 %v2640, %v2649
        %v2677 = vadd.f32 %v2641, %v2649
        %v2678 = vadd.f32 %v2642, %v2649
        %v2679 = vadd.f32 %v2643, %v2649
        %v2680 = vadd.f32 %v2644, %v2649
        %v2681 = vadd.f32 %v2645, %v2649
        %v2682 = vadd.f32 %v2646, %v2649
        %v2683 = vmax.f32 %v2651, 0.0
        %v2684 = vmax.f32 %v2652, 0.0
        %v2685 = vmax.f32 %v2653, 0.0
        %v2686 = vmax.f32 %v2654, 0.0
        %v2687 = vmax.f32 %v2655, 0.0
        %v2688 = vmax.f32 %v2656, 0.0
        %v2689 = vmax.f32 %v2657, 0.0
        %v2690 = vmax.f32 %v2658, 0.0
        %v2691 = vmax.f32 %v2659, 0.0
        %v2692 = vmax.f32 %v2660, 0.0
        %v2693 = vmax.f32 %v2661, 0.0
        %v2694 = vmax.f32 %v2662, 0.0
        %v2695 = vmax.f32 %v2663, 0.0
        %v2696 = vmax.f32 %v2664, 0.0
        %v2697 = vmax.f32 %v2665, 0.0
        %v2698 = vmax.f32 %v2666, 0.0
        %v2699 = vmax.f32 %v2667, 0.0
        %v2700 = vmax.f32 %v2668, 0.0
        %v2701 = vmax.f32 %v2669, 0.0
        %v2702 = vmax.f32 %v2670, 0.0
        %v2703 = vmax.f32 %v2671, 0.0
        %v2704 = vmax.f32 %v2672, 0.0
        %v2705 = vmax.f32 %v2673, 0.0
        %v2706 = vmax.f32 %v2674, 0.0
        %v2707 = vmax.f32 %v2675, 0.0
        %v2708 = vmax.f32 %v2676, 0.0
        %v2709 = vmax.f32 %v2677, 0.0
        %v2710 = vmax.f32 %v2678, 0.0
        %v2711 = vmax.f32 %v2679, 0.0
        %v2712 = vmax.f32 %v2680, 0.0
        %v2713 = vmax.f32 %v2681, 0.0
        %v2714 = vmax.f32 %v2682, 0.0
        %v2715 = vpack.c.bf16 %v2684, %v2683
        %v2716 = vpack.c.bf16 %v2686, %v2685
        %v2717 = vpack.c.bf16 %v2688, %v2687
        %v2718 = vpack.c.bf16 %v2690, %v2689
        %v2719 = vpack.c.bf16 %v2692, %v2691
        %v2720 = vpack.c.bf16 %v2694, %v2693
        %v2721 = vpack.c.bf16 %v2696, %v2695
        %v2722 = vpack.c.bf16 %v2698, %v2697
        %v2723 = vpack.c.bf16 %v2700, %v2699
        %v2724 = vpack.c.bf16 %v2702, %v2701
        %v2725 = vpack.c.bf16 %v2704, %v2703
        %v2726 = vpack.c.bf16 %v2706, %v2705
        %v2727 = vpack.c.bf16 %v2708, %v2707
        %v2728 = vpack.c.bf16 %v2710, %v2709
        %v2729 = vpack.c.bf16 %v2712, %v2711
        %v2730 = vpack.c.bf16 %v2714, %v2713
        %v2731 = vld [vmem:[%s7] sm:$0x3]
        %v2732 = vld [vmem:[%s8] sm:$0x1]
        %v2734 = vperm.slane %v2732, 0
        %v2737 = vsel %vm1435, %v2715, 0
        %v2740 = vsel %vm1435, %v2716, 0
        %v2743 = vsel %vm1435, %v2717, 0
        %v2746 = vsel %vm1435, %v2718, 0
        %v2749 = vsel %vm1435, %v2719, 0
        %v2752 = vsel %vm1435, %v2720, 0
        %v2755 = vsel %vm1435, %v2721, 0
        %v2758 = vsel %vm1435, %v2722, 0
        %v2761 = vsel %vm1435, %v2723, 0
        %v2764 = vsel %vm1435, %v2724, 0
        %v2767 = vsel %vm1435, %v2725, 0
        %v2770 = vsel %vm1435, %v2726, 0
        %v2773 = vsel %vm1435, %v2727, 0
        %v2776 = vsel %vm1435, %v2728, 0
        %v2779 = vsel %vm1435, %v2729, 0
        %v2782 = vsel %vm1435, %v2730, 0
        %v2785 = vsel %vm1468, %v2731, 0
        %2787 = vmatpush.bf16.msra.mxu0 0
        %2788 = vmatpush.bf16.msra.mxu0 0
        %2789 = vmatpush.bf16.msra.mxu0 0
        %2790 = vmatpush.bf16.msra.mxu0 0
        %2791 = vmatpush.bf16.msra.mxu0 0
        %2792 = vmatpush.bf16.msra.mxu0 0
        %2793 = vmatpush.bf16.msra.mxu0 0
        %2794 = vmatpush.bf16.msra.mxu0 %v2785
        %2795 = vmatmul.bf16.gmra.mxu0 %v2737
        %v2796 = vpop.f32.mrf.mxu0
        %v2797 = vadd.f32 %v2734, %v2796
        %v2798 = vpop.f32.mrf.mxu0
        %v2799 = vadd.f32 %v2734, %v2798
        %2800 = vmatmul.bf16.gmra.mxu0 %v2740
        %v2801 = vpop.f32.mrf.mxu0
        %v2802 = vadd.f32 %v2734, %v2801
        %v2803 = vpop.f32.mrf.mxu0
        %v2804 = vadd.f32 %v2734, %v2803
        %2805 = vmatmul.bf16.gmra.mxu0 %v2743
        %v2806 = vpop.f32.mrf.mxu0
        %v2807 = vadd.f32 %v2734, %v2806
        %v2808 = vpop.f32.mrf.mxu0
        %v2809 = vadd.f32 %v2734, %v2808
        %2810 = vmatmul.bf16.gmra.mxu0 %v2746
        %v2811 = vpop.f32.mrf.mxu0
        %v2812 = vadd.f32 %v2734, %v2811
        %v2813 = vpop.f32.mrf.mxu0
        %v2814 = vadd.f32 %v2734, %v2813
        %2815 = vmatmul.bf16.gmra.mxu0 %v2749
        %v2816 = vpop.f32.mrf.mxu0
        %v2817 = vadd.f32 %v2734, %v2816
        %v2818 = vpop.f32.mrf.mxu0
        %v2819 = vadd.f32 %v2734, %v2818
        %2820 = vmatmul.bf16.gmra.mxu0 %v2752
        %v2821 = vpop.f32.mrf.mxu0
        %v2822 = vadd.f32 %v2734, %v2821
        %v2823 = vpop.f32.mrf.mxu0
        %v2824 = vadd.f32 %v2734, %v2823
        %2825 = vmatmul.bf16.gmra.mxu0 %v2755
        %v2826 = vpop.f32.mrf.mxu0
        %v2827 = vadd.f32 %v2734, %v2826
        %v2828 = vpop.f32.mrf.mxu0
        %v2829 = vadd.f32 %v2734, %v2828
        %2830 = vmatmul.bf16.gmra.mxu0 %v2758
        %v2831 = vpop.f32.mrf.mxu0
        %v2832 = vadd.f32 %v2734, %v2831
        %v2833 = vpop.f32.mrf.mxu0
        %v2834 = vadd.f32 %v2734, %v2833
        %2835 = vmatmul.bf16.gmra.mxu0 %v2761
        %v2836 = vpop.f32.mrf.mxu0
        %v2837 = vadd.f32 %v2734, %v2836
        %v2838 = vpop.f32.mrf.mxu0
        %v2839 = vadd.f32 %v2734, %v2838
        %2840 = vmatmul.bf16.gmra.mxu0 %v2764
        %v2841 = vpop.f32.mrf.mxu0
        %v2842 = vadd.f32 %v2734, %v2841
        %v2843 = vpop.f32.mrf.mxu0
        %v2844 = vadd.f32 %v2734, %v2843
        %2845 = vmatmul.bf16.gmra.mxu0 %v2767
        %v2846 = vpop.f32.mrf.mxu0
        %v2847 = vadd.f32 %v2734, %v2846
        %v2848 = vpop.f32.mrf.mxu0
        %v2849 = vadd.f32 %v2734, %v2848
        %2850 = vmatmul.bf16.gmra.mxu0 %v2770
        %v2851 = vpop.f32.mrf.mxu0
        %v2852 = vadd.f32 %v2734, %v2851
        %v2853 = vpop.f32.mrf.mxu0
        %v2854 = vadd.f32 %v2734, %v2853
        %2855 = vmatmul.bf16.gmra.mxu0 %v2773
        %v2856 = vpop.f32.mrf.mxu0
        %v2857 = vadd.f32 %v2734, %v2856
        %v2858 = vpop.f32.mrf.mxu0
        %v2859 = vadd.f32 %v2734, %v2858
        %2860 = vmatmul.bf16.gmra.mxu0 %v2776
        %v2861 = vpop.f32.mrf.mxu0
        %v2862 = vadd.f32 %v2734, %v2861
        %v2863 = vpop.f32.mrf.mxu0
        %v2864 = vadd.f32 %v2734, %v2863
        %2865 = vmatmul.bf16.gmra.mxu0 %v2779
        %v2866 = vpop.f32.mrf.mxu0
        %v2867 = vadd.f32 %v2734, %v2866
        %v2868 = vpop.f32.mrf.mxu0
        %v2869 = vadd.f32 %v2734, %v2868
        %2870 = vmatmul.bf16.gmra.mxu0 %v2782
        %v2871 = vpop.f32.mrf.mxu0
        %v2872 = vadd.f32 %v2734, %v2871
        %v2873 = vpop.f32.mrf.mxu0
        %v2874 = vadd.f32 %v2734, %v2873
        %2875 = vdwg.mxu0
        %v2876 = vunpack.c.l.bf16 %v499
        %v2877 = vunpack.c.l.bf16 %v500
        %v2878 = vunpack.c.l.bf16 %v501
        %v2879 = vunpack.c.l.bf16 %v502
        %v2880 = vunpack.c.l.bf16 %v503
        %v2881 = vunpack.c.l.bf16 %v504
        %v2882 = vunpack.c.l.bf16 %v505
        %v2883 = vunpack.c.l.bf16 %v506
        %v2884 = vunpack.c.l.bf16 %v507
        %v2885 = vunpack.c.l.bf16 %v508
        %v2886 = vunpack.c.l.bf16 %v509
        %v2887 = vunpack.c.l.bf16 %v510
        %v2888 = vunpack.c.l.bf16 %v511
        %v2889 = vunpack.c.l.bf16 %v512
        %v2890 = vunpack.c.l.bf16 %v513
        %v2891 = vunpack.c.l.bf16 %v514
        %v2892 = vunpack.c.l.bf16 %v515
        %v2893 = vunpack.c.l.bf16 %v516
        %v2894 = vunpack.c.l.bf16 %v517
        %v2895 = vunpack.c.l.bf16 %v518
        %v2896 = vunpack.c.l.bf16 %v519
        %v2897 = vunpack.c.l.bf16 %v520
        %v2898 = vunpack.c.l.bf16 %v521
        %v2899 = vunpack.c.l.bf16 %v522
        %v2900 = vunpack.c.l.bf16 %v523
        %v2901 = vunpack.c.l.bf16 %v524
        %v2902 = vunpack.c.l.bf16 %v525
        %v2903 = vunpack.c.l.bf16 %v526
        %v2904 = vunpack.c.l.bf16 %v527
        %v2905 = vunpack.c.l.bf16 %v528
        %v2906 = vunpack.c.l.bf16 %v529
        %v2907 = vunpack.c.l.bf16 %v530
        %v2908 = vadd.f32 %v2797, %v2876
        %v2909 = vadd.f32 %v2799, %v2877
        %v2910 = vadd.f32 %v2802, %v2878
        %v2911 = vadd.f32 %v2804, %v2879
        %v2912 = vadd.f32 %v2807, %v2880
        %v2913 = vadd.f32 %v2809, %v2881
        %v2914 = vadd.f32 %v2812, %v2882
        %v2915 = vadd.f32 %v2814, %v2883
        %v2916 = vadd.f32 %v2817, %v2884
        %v2917 = vadd.f32 %v2819, %v2885
        %v2918 = vadd.f32 %v2822, %v2886
        %v2919 = vadd.f32 %v2824, %v2887
        %v2920 = vadd.f32 %v2827, %v2888
        %v2921 = vadd.f32 %v2829, %v2889
        %v2922 = vadd.f32 %v2832, %v2890
        %v2923 = vadd.f32 %v2834, %v2891
        %v2924 = vadd.f32 %v2837, %v2892
        %v2925 = vadd.f32 %v2839, %v2893
        %v2926 = vadd.f32 %v2842, %v2894
        %v2927 = vadd.f32 %v2844, %v2895
        %v2928 = vadd.f32 %v2847, %v2896
        %v2929 = vadd.f32 %v2849, %v2897
        %v2930 = vadd.f32 %v2852, %v2898
        %v2931 = vadd.f32 %v2854, %v2899
        %v2932 = vadd.f32 %v2857, %v2900
        %v2933 = vadd.f32 %v2859, %v2901
        %v2934 = vadd.f32 %v2862, %v2902
        %v2935 = vadd.f32 %v2864, %v2903
        %v2936 = vadd.f32 %v2867, %v2904
        %v2937 = vadd.f32 %v2869, %v2905
        %v2938 = vadd.f32 %v2872, %v2906
        %v2939 = vadd.f32 %v2874, %v2907
        %v2940 = vmax.f32 %v2908, 0.0
        %v2941 = vmax.f32 %v2909, 0.0
        %v2942 = vmax.f32 %v2910, 0.0
        %v2943 = vmax.f32 %v2911, 0.0
        %v2944 = vmax.f32 %v2912, 0.0
        %v2945 = vmax.f32 %v2913, 0.0
        %v2946 = vmax.f32 %v2914, 0.0
        %v2947 = vmax.f32 %v2915, 0.0
        %v2948 = vmax.f32 %v2916, 0.0
        %v2949 = vmax.f32 %v2917, 0.0
        %v2950 = vmax.f32 %v2918, 0.0
        %v2951 = vmax.f32 %v2919, 0.0
        %v2952 = vmax.f32 %v2920, 0.0
        %v2953 = vmax.f32 %v2921, 0.0
        %v2954 = vmax.f32 %v2922, 0.0
        %v2955 = vmax.f32 %v2923, 0.0
        %v2956 = vmax.f32 %v2924, 0.0
        %v2957 = vmax.f32 %v2925, 0.0
        %v2958 = vmax.f32 %v2926, 0.0
        %v2959 = vmax.f32 %v2927, 0.0
        %v2960 = vmax.f32 %v2928, 0.0
        %v2961 = vmax.f32 %v2929, 0.0
        %v2962 = vmax.f32 %v2930, 0.0
        %v2963 = vmax.f32 %v2931, 0.0
        %v2964 = vmax.f32 %v2932, 0.0
        %v2965 = vmax.f32 %v2933, 0.0
        %v2966 = vmax.f32 %v2934, 0.0
        %v2967 = vmax.f32 %v2935, 0.0
        %v2968 = vmax.f32 %v2936, 0.0
        %v2969 = vmax.f32 %v2937, 0.0
        %v2970 = vmax.f32 %v2938, 0.0
        %v2971 = vmax.f32 %v2939, 0.0
        %v2972 = vpack.c.bf16 %v2940, %v2940
        %v2973 = vpack.c.bf16 %v2941, %v2941
        %v2974 = vpack.c.bf16 %v2942, %v2942
        %v2975 = vpack.c.bf16 %v2943, %v2943
        %v2976 = vpack.c.bf16 %v2944, %v2944
        %v2977 = vpack.c.bf16 %v2945, %v2945
        %v2978 = vpack.c.bf16 %v2946, %v2946
        %v2979 = vpack.c.bf16 %v2947, %v2947
        %v2980 = vpack.c.bf16 %v2948, %v2948
        %v2981 = vpack.c.bf16 %v2949, %v2949
        %v2982 = vpack.c.bf16 %v2950, %v2950
        %v2983 = vpack.c.bf16 %v2951, %v2951
        %v2984 = vpack.c.bf16 %v2952, %v2952
        %v2985 = vpack.c.bf16 %v2953, %v2953
        %v2986 = vpack.c.bf16 %v2954, %v2954
        %v2987 = vpack.c.bf16 %v2955, %v2955
        %v2988 = vpack.c.bf16 %v2956, %v2956
        %v2989 = vpack.c.bf16 %v2957, %v2957
        %v2990 = vpack.c.bf16 %v2958, %v2958
        %v2991 = vpack.c.bf16 %v2959, %v2959
        %v2992 = vpack.c.bf16 %v2960, %v2960
        %v2993 = vpack.c.bf16 %v2961, %v2961
        %v2994 = vpack.c.bf16 %v2962, %v2962
        %v2995 = vpack.c.bf16 %v2963, %v2963
        %v2996 = vpack.c.bf16 %v2964, %v2964
        %v2997 = vpack.c.bf16 %v2965, %v2965
        %v2998 = vpack.c.bf16 %v2966, %v2966
        %v2999 = vpack.c.bf16 %v2967, %v2967
        %v3000 = vpack.c.bf16 %v2968, %v2968
        %v3001 = vpack.c.bf16 %v2969, %v2969
        %v3002 = vpack.c.bf16 %v2970, %v2970
        %v3003 = vpack.c.bf16 %v2971, %v2971
        %vm3004 = vcmask 125952
        %3005 = vst.msk [vmem:[%s484] sm:$0xf] %vm3004, %v2972
        %3006 = vst.msk [vmem:[%s484 + $0x4] sm:$0xf] %vm3004, %v2973
        %3007 = vst.msk [vmem:[%s484 + $0x8] sm:$0xf] %vm3004, %v2974
        %3008 = vst.msk [vmem:[%s484 + $0xc] sm:$0xf] %vm3004, %v2975
        %3009 = vst.msk [vmem:[%s484 + $0x10] sm:$0xf] %vm3004, %v2976
        %3010 = vst.msk [vmem:[%s484 + $0x14] sm:$0xf] %vm3004, %v2977
        %3011 = vst.msk [vmem:[%s484 + $0x18] sm:$0xf] %vm3004, %v2978
        %3012 = vst.msk [vmem:[%s484 + $0x1c] sm:$0xf] %vm3004, %v2979
        %3013 = vst.msk [vmem:[%s484 + $0x20] sm:$0xf] %vm3004, %v2980
        %3014 = vst.msk [vmem:[%s484 + $0x24] sm:$0xf] %vm3004, %v2981
        %3015 = vst.msk [vmem:[%s484 + $0x28] sm:$0xf] %vm3004, %v2982
        %3016 = vst.msk [vmem:[%s484 + $0x2c] sm:$0xf] %vm3004, %v2983
        %3017 = vst.msk [vmem:[%s484 + $0x30] sm:$0xf] %vm3004, %v2984
        %3018 = vst.msk [vmem:[%s484 + $0x34] sm:$0xf] %vm3004, %v2985
        %3019 = vst.msk [vmem:[%s484 + $0x38] sm:$0xf] %vm3004, %v2986
        %3020 = vst.msk [vmem:[%s484 + $0x3c] sm:$0xf] %vm3004, %v2987
        %3021 = vst.msk [vmem:[%s484 + $0x40] sm:$0xf] %vm3004, %v2988
        %3022 = vst.msk [vmem:[%s484 + $0x44] sm:$0xf] %vm3004, %v2989
        %3023 = vst.msk [vmem:[%s484 + $0x48] sm:$0xf] %vm3004, %v2990
        %3024 = vst.msk [vmem:[%s484 + $0x4c] sm:$0xf] %vm3004, %v2991
        %3025 = vst.msk [vmem:[%s484 + $0x50] sm:$0xf] %vm3004, %v2992
        %3026 = vst.msk [vmem:[%s484 + $0x54] sm:$0xf] %vm3004, %v2993
        %3027 = vst.msk [vmem:[%s484 + $0x58] sm:$0xf] %vm3004, %v2994
        %3028 = vst.msk [vmem:[%s484 + $0x5c] sm:$0xf] %vm3004, %v2995
        %3029 = vst.msk [vmem:[%s484 + $0x60] sm:$0xf] %vm3004, %v2996
        %3030 = vst.msk [vmem:[%s484 + $0x64] sm:$0xf] %vm3004, %v2997
        %3031 = vst.msk [vmem:[%s484 + $0x68] sm:$0xf] %vm3004, %v2998
        %3032 = vst.msk [vmem:[%s484 + $0x6c] sm:$0xf] %vm3004, %v2999
        %3033 = vst.msk [vmem:[%s484 + $0x70] sm:$0xf] %vm3004, %v3000
        %3034 = vst.msk [vmem:[%s484 + $0x74] sm:$0xf] %vm3004, %v3001
        %3035 = vst.msk [vmem:[%s484 + $0x78] sm:$0xf] %vm3004, %v3002
        %3036 = vst.msk [vmem:[%s484 + $0x7c] sm:$0xf] %vm3004, %v3003
        %s3037 = sand.u32 %s277, 1
        %s3038 = scalar_lea.sflag [#allocation4], %s3037
        %s3039 = sand.u32 %s277, 1
        %s3040 = smul.addr %s3039, 128
        %s3041 = scalar_lea.vmem [#allocation8], %s3040
        // Predicated region
        $region69: #{tpu_custom_call.1} parent=55 // pred_check
          %p3042 = pneg %p287
        $region70: #{tpu_custom_call.1} parent=55 // pred_check_branch
          %3044 = sbr.rel (%p3042) target = $region72
        $region71: #{tpu_custom_call.1} parent=55 // pred_region
          %s3045 = smul.u32 16, %s34
          %3047 = vsyncadd %s3038, 0
          %s3048 = smul.addr %s3045, 2
          %s3049 = smul.addr %s33, 32
          %s3050 = sadd.s32 %s3048, %s3049
          %s3051 = smul.addr %s3050, 4
          %s3052 = scalar_lea.hbm %s9, %s3051
          %s3053 = sshll.u32 %s3041, 4
          %s3054 = int_to_ptr.vmem [resolvable:$true] %s3053
          %s3055 = sshll.u32 %s3052, 4
          %s3056 = int_to_ptr.hbm [resolvable:$true] %s3055
          %3061 = dma.vmem_to_hbm [thread:$0]  %s3054, 2048, %s3056, %s3038, 64, 64, 4
        $region72: #{tpu_custom_call.1} parent=55 // pred_fallthru
          _
      $region56: #{tpu_custom_call.1} parent=5 // pred_fallthru
        _
      %p3062 = scmp.le.s32.totalorder 2, %s24
      // Predicated region
      $region73: #{tpu_custom_call.1} parent=5 // pred_check
        %p3063 = pneg %p3062
      $region74: #{tpu_custom_call.1} parent=5 // pred_check_branch
        %3065 = sbr.rel (%p3063) target = $region76
      $region75: #{tpu_custom_call.1} parent=5 // pred_region
        %s3066 = ssub.s32 %s24, 2
        // Predicated region
        $region77: #{tpu_custom_call.1} parent=75 // pred_check
          %p3067 = pneg %p293
        $region78: #{tpu_custom_call.1} parent=75 // pred_check_branch
          %3069 = sbr.rel (%p3067) target = $region80
        $region79: #{tpu_custom_call.1} parent=75 // pred_region
          %s3070 = sand.u32 %s278, 1
          %s3071 = scalar_lea.sflag [#allocation4], %s3070
          %s3072 = sand.u32 %s278, 1
          %s3073 = smul.addr %s3072, 128
          %s3074 = scalar_lea.vmem [#allocation8], %s3073
          %3076 = dma.done %s3071, 2048
        $region80: #{tpu_custom_call.1} parent=75 // pred_fallthru
          _
      $region76: #{tpu_custom_call.1} parent=5 // pred_fallthru
        _
    $region6: #{tpu_custom_call.1} parent=1 // loop_footer
      %s28 = sadd.s32 1, %s24
    $region7: #{tpu_custom_call.1} parent=1 // loop_footer_branch
      %23 = sbr.rel target = $region3
    $region8: #{tpu_custom_call.1} parent=1 // loop_exit
      _
    %3077 = vsyncpa [#allocation3], 1
    %s3078 = scalar_lea.sflag [#allocation3], 1
    %3079 = vsyncpa %s3078, 1
    %3080 = vsyncpa [#allocation6], 1
    %s3081 = scalar_lea.sflag [#allocation6], 1
    %3082 = vsyncpa %s3081, 1
    %3083 = vsyncpa [#allocation4], 1
    %s3084 = scalar_lea.sflag [#allocation4], 1
    %3085 = vsyncpa %s3084, 1

</llo_original>
